<compile_context>
chip_gen: v5e
topology: v5e:2x2
jax: 0.10.0
libtpu: 0.0.40
codegen_flags: <defaults>
</compile_context>

<pallas_src>
import functools

import jax
import jax.numpy as jnp
from jax.experimental import pallas as pl
from jax.experimental.pallas import tpu as pltpu


# ---------------------------------------------------------------------------
# Kernels
# ---------------------------------------------------------------------------

def _proj_kernel(x_ref, w_ref, o_ref, acc_ref):
    """Tiled matmul Y = X @ W (bf16 MXU inputs, f32 accumulation).

    grid = (row tile i [parallel], contraction tile k [arbitrary]).
    """
    k = pl.program_id(1)

    @pl.when(k == 0)
    def _():
        acc_ref[...] = jnp.zeros_like(acc_ref)

    acc_ref[...] += jnp.dot(x_ref[...], w_ref[...],
                            preferred_element_type=jnp.float32)

    @pl.when(k == pl.num_programs(1) - 1)
    def _():
        o_ref[...] = acc_ref[...].astype(o_ref.dtype)


def _agg_kernel(a_ref, xp_ref, xs_ref, dinv_ref, b_ref, o_ref, acc_ref):
    """One SAGEConv(mean) layer on pre-projected features.

    grid = (row tile i [parallel], neighbor tile k [arbitrary]).
    acc accumulates (A @ XP) in f32; finalize: relu(XS + (1/deg)*acc + b).
    """
    k = pl.program_id(1)

    @pl.when(k == 0)
    def _():
        acc_ref[...] = jnp.zeros_like(acc_ref)

    acc_ref[...] += jnp.dot(a_ref[...], xp_ref[...],
                            preferred_element_type=jnp.float32)

    @pl.when(k == pl.num_programs(1) - 1)
    def _():
        h = (xs_ref[...].astype(jnp.float32)
             + dinv_ref[...] * acc_ref[...]
             + b_ref[...])
        o_ref[...] = jnp.maximum(h, 0.0).astype(o_ref.dtype)  # relu, f32 epilogue


def _agg_clf_kernel(a_ref, xp_ref, xs_ref, dinv_ref, b_ref, wc_ref, bc_ref,
                    o_ref, acc_ref, *, num_classes):
    """Second SAGEConv(mean) (pre-projected) fused with Linear head + log_softmax."""
    k = pl.program_id(1)

    @pl.when(k == 0)
    def _():
        acc_ref[...] = jnp.zeros_like(acc_ref)

    acc_ref[...] += jnp.dot(a_ref[...], xp_ref[...],
                            preferred_element_type=jnp.float32)

    @pl.when(k == pl.num_programs(1) - 1)
    def _():
        h = (xs_ref[...].astype(jnp.float32)
             + dinv_ref[...] * acc_ref[...]
             + b_ref[...])
        h = jnp.maximum(h, 0.0)

        logits = (jnp.dot(h.astype(wc_ref.dtype), wc_ref[...],
                          preferred_element_type=jnp.float32)
                  + bc_ref[...])
        # mask padded class columns so they do not corrupt the normalizer
        col = jax.lax.broadcasted_iota(jnp.int32, logits.shape, 1)
        logits = jnp.where(col < num_classes, logits, -1e30)

        m = jnp.max(logits, axis=-1, keepdims=True)
        s = logits - m
        denom = jnp.sum(jnp.exp(s), axis=-1, keepdims=True)   # exp on EUP
        o_ref[...] = (s - jnp.log(denom)).astype(o_ref.dtype)  # log_softmax


# ---------------------------------------------------------------------------
# Wrappers
# ---------------------------------------------------------------------------

def _round_up(v, m):
    return ((v + m - 1) // m) * m


def _pad2(a, shape, dtype):
    out = jnp.zeros(shape, dtype)
    return out.at[: a.shape[0], : a.shape[1]].set(a.astype(dtype))


def _pad_cat(ws, wn, rows_pad, h_pad, dtype):
    """Concatenate [W_self | W_neigh] along columns, zero-padded to (rows_pad, 2*h_pad)."""
    out = jnp.zeros((rows_pad, 2 * h_pad), dtype)
    out = out.at[: ws.shape[0], : ws.shape[1]].set(ws.astype(dtype))
    out = out.at[: wn.shape[0], h_pad: h_pad + wn.shape[1]].set(wn.astype(dtype))
    return out


def _proj(x_p, w_p, tm, out_dtype=jnp.bfloat16):
    """Y = X @ W (used to pre-project features: Y = [XS | XP])."""
    n_pad, f_pad = x_p.shape
    cols = w_p.shape[1]
    # largest contraction tile in {512, 256, 128} that divides f_pad
    tkc = next(t for t in (512, 256, 128) if f_pad % t == 0)
    grid = (n_pad // tm, f_pad // tkc)

    flops = 2 * n_pad * f_pad * cols
    bytes_accessed = (x_p.size * x_p.dtype.itemsize
                      + grid[0] * w_p.size * w_p.dtype.itemsize   # W re-streamed per row tile
                      + n_pad * cols * jnp.dtype(out_dtype).itemsize)

    return pl.pallas_call(
        _proj_kernel,
        out_shape=jax.ShapeDtypeStruct((n_pad, cols), out_dtype),
        grid_spec=pltpu.PrefetchScalarGridSpec(
            num_scalar_prefetch=0,
            grid=grid,
            in_specs=[
                pl.BlockSpec((tm, tkc), lambda i, k: (i, k)),    # X tile
                pl.BlockSpec((tkc, cols), lambda i, k: (k, 0)),  # W tile
            ],
            out_specs=pl.BlockSpec((tm, cols), lambda i, k: (i, 0)),
            scratch_shapes=[pltpu.VMEM((tm, cols), jnp.float32)],
        ),
        compiler_params=pltpu.CompilerParams(
            dimension_semantics=("parallel", "arbitrary")),
        cost_estimate=pl.CostEstimate(flops=int(flops), transcendentals=0,
                                      bytes_accessed=int(bytes_accessed)),
    )(x_p, w_p)


def _sage_agg(a_p, y_p, dinv_p, b_p, tm, tk, out_dtype):
    """relu(XS + (1/deg) * (A @ XP) + b), with Y = [XS | XP] passed once, sliced via BlockSpecs."""
    n_pad = a_p.shape[0]
    h_pad = y_p.shape[1] // 2
    grid = (n_pad // tm, n_pad // tk)

    flops = 2 * n_pad * n_pad * h_pad + 6 * n_pad * h_pad
    bytes_accessed = (a_p.size * a_p.dtype.itemsize
                      + grid[0] * n_pad * h_pad * y_p.dtype.itemsize  # XP re-streamed per row tile
                      + n_pad * h_pad * y_p.dtype.itemsize            # XS (once per row tile)
                      + dinv_p.size * 4 + b_p.size * 4
                      + n_pad * h_pad * jnp.dtype(out_dtype).itemsize)

    return pl.pallas_call(
        _agg_kernel,
        out_shape=jax.ShapeDtypeStruct((n_pad, h_pad), out_dtype),
        grid_spec=pltpu.PrefetchScalarGridSpec(
            num_scalar_prefetch=0,
            grid=grid,
            in_specs=[
                pl.BlockSpec((tm, tk), lambda i, k: (i, k)),      # A (0/1, bf16-exact)
                pl.BlockSpec((tk, h_pad), lambda i, k: (k, 1)),   # XP neighbor rows (right half of Y)
                pl.BlockSpec((tm, h_pad), lambda i, k: (i, 0)),   # XS self rows (left half of Y)
                pl.BlockSpec((tm, 1), lambda i, k: (i, 0)),       # 1/deg (f32)
                pl.BlockSpec((1, h_pad), lambda i, k: (0, 0)),    # bias (f32)
            ],
            out_specs=pl.BlockSpec((tm, h_pad), lambda i, k: (i, 0)),
            scratch_shapes=[pltpu.VMEM((tm, h_pad), jnp.float32)],
        ),
        compiler_params=pltpu.CompilerParams(
            dimension_semantics=("parallel", "arbitrary")),
        cost_estimate=pl.CostEstimate(flops=int(flops), transcendentals=0,
                                      bytes_accessed=int(bytes_accessed)),
    )(a_p, y_p, y_p, dinv_p, b_p)


def _sage_clf_agg(a_p, y_p, dinv_p, b_p, wc_p, bc_p, tm, tk, num_classes):
    """Second SAGE layer aggregation fused with classifier + masked log_softmax."""
    n_pad = a_p.shape[0]
    h_pad = y_p.shape[1] // 2
    c_pad = wc_p.shape[1]
    grid = (n_pad // tm, n_pad // tk)

    flops = (2 * n_pad * n_pad * h_pad
             + 2 * n_pad * h_pad * c_pad
             + 8 * n_pad * (h_pad + c_pad))
    bytes_accessed = (a_p.size * a_p.dtype.itemsize
                      + grid[0] * n_pad * h_pad * y_p.dtype.itemsize  # XP re-streamed
                      + n_pad * h_pad * y_p.dtype.itemsize            # XS
                      + grid[0] * wc_p.size * wc_p.dtype.itemsize     # W_clf re-streamed
                      + dinv_p.size * 4 + b_p.size * 4 + bc_p.size * 4
                      + n_pad * c_pad * 4)

    kernel = functools.partial(_agg_clf_kernel, num_classes=num_classes)
    return pl.pallas_call(
        kernel,
        out_shape=jax.ShapeDtypeStruct((n_pad, c_pad), jnp.float32),
        grid_spec=pltpu.PrefetchScalarGridSpec(
            num_scalar_prefetch=0,
            grid=grid,
            in_specs=[
                pl.BlockSpec((tm, tk), lambda i, k: (i, k)),      # A (0/1)
                pl.BlockSpec((tk, h_pad), lambda i, k: (k, 1)),   # XP2 neighbor rows
                pl.BlockSpec((tm, h_pad), lambda i, k: (i, 0)),   # XS2 self rows
                pl.BlockSpec((tm, 1), lambda i, k: (i, 0)),       # 1/deg
                pl.BlockSpec((1, h_pad), lambda i, k: (0, 0)),    # b2
                pl.BlockSpec((h_pad, c_pad), lambda i, k: (0, 0)),  # W_clf
                pl.BlockSpec((1, c_pad), lambda i, k: (0, 0)),      # b_clf
            ],
            out_specs=pl.BlockSpec((tm, c_pad), lambda i, k: (i, 0)),
            scratch_shapes=[pltpu.VMEM((tm, h_pad), jnp.float32)],
        ),
        compiler_params=pltpu.CompilerParams(
            dimension_semantics=("parallel", "arbitrary")),
        cost_estimate=pl.CostEstimate(flops=int(flops),
                                      transcendentals=int(n_pad * (c_pad + 1)),
                                      bytes_accessed=int(bytes_accessed)),
    )(a_p, y_p, y_p, dinv_p, b_p, wc_p, bc_p)


def sagenet_forward(adj, x, params, out_dim):
    """adj: dense 0/1 adjacency [N,N] (no self loops); x: features [N,F]."""
    n, in_dim = x.shape
    hidden = params["w_self1"].shape[1]

    # Tile selection: big tiles amortize the ~0.35us per-grid-step overhead and
    # fill the 256x256 MXU on v6e/v7x; after the pre-projection rewrite the
    # double-buffered working set is only a few MiB even at 512, well inside the
    # default scoped VMEM on every generation (incl. v7x's 64 MiB physical).
    if n >= 1024:
        tm = 512
    elif n >= 256:
        tm = 256
    else:
        tm = 128
    tk = tm
    n_pad = _round_up(n, tm)
    f_pad = _round_up(in_dim, 128)
    h_pad = _round_up(hidden, 128)
    c_pad = _round_up(out_dim, 128)

    cdt = jnp.bfloat16  # MXU input dtype; all accumulation stays f32 in-kernel

    # 0/1 adjacency is exact in bf16; the mean-aggregator 1/deg scale is applied
    # in f32 in the finalize epilogue (no bf16 rounding of 1/deg).
    a_p = _pad2(adj, (n_pad, n_pad), cdt)
    deg = jnp.clip(jnp.sum(adj.astype(jnp.float32), axis=1, keepdims=True), 1.0, None)
    dinv_p = _pad2(1.0 / deg, (n_pad, 1), jnp.float32)

    x_p = _pad2(x, (n_pad, f_pad), cdt)

    w1 = _pad_cat(params["w_self1"], params["w_neigh1"], f_pad, h_pad, cdt)
    b1 = _pad2(params["b1"], (1, h_pad), jnp.float32)
    w2 = _pad_cat(params["w_self2"], params["w_neigh2"], h_pad, h_pad, cdt)
    b2 = _pad2(params["b2"], (1, h_pad), jnp.float32)
    wc = _pad2(params["w_clf"], (h_pad, c_pad), cdt)
    bc = _pad2(params["b_clf"], (1, c_pad), jnp.float32)

    # Layer 1: cheap O(N*F*H) pre-projection, then O(N^2*H) aggregation.
    y1 = _proj(x_p, w1, tm)                                   # [XS1 | XP1]
    h1 = _sage_agg(a_p, y1, dinv_p, b1, tm, tk, out_dtype=cdt)
    # NOTE: padded H1 rows equal relu(b1) != 0, but padded A columns are zero and
    # padded output rows are sliced off, so they never affect valid outputs.

    # Layer 2 + classifier + log_softmax (aggregation + head fused, no HBM round-trip).
    y2 = _proj(h1, w2, tm)                                    # [XS2 | XP2]
    out_p = _sage_clf_agg(a_p, y2, dinv_p, b2, wc, bc, tm, tk, out_dim)
    return out_p[:n, :out_dim]


# ---------------------------------------------------------------------------
# Pure-JAX reference (f32) for validation
# ---------------------------------------------------------------------------

def reference_forward(a_norm, x, params):
    def layer(h, ws, wn, b):
        return jax.nn.relu(h @ ws + (a_norm @ h) @ wn + b)
    h = layer(x, params["w_self1"], params["w_neigh1"], params["b1"])
    h = layer(h, params["w_self2"], params["w_neigh2"], params["b2"])
    logits = h @ params["w_clf"] + params["b_clf"]
    return jax.nn.log_softmax(logits, axis=1)


# ---------------------------------------------------------------------------
# Deterministic parameter / input setup
# ---------------------------------------------------------------------------

def init_params(key, in_dim, hidden_dim, out_dim):
    ks = jax.random.split(key, 6)
    scale = 0.1
    return {
        "w_self1":  scale * jax.random.normal(ks[0], (in_dim, hidden_dim), jnp.float32),
        "w_neigh1": scale * jax.random.normal(ks[1], (in_dim, hidden_dim), jnp.float32),
        "b1":       jnp.zeros((1, hidden_dim), jnp.float32),
        "w_self2":  scale * jax.random.normal(ks[2], (hidden_dim, hidden_dim), jnp.float32),
        "w_neigh2": scale * jax.random.normal(ks[3], (hidden_dim, hidden_dim), jnp.float32),
        "b2":       jnp.zeros((1, hidden_dim), jnp.float32),
        "w_clf":    scale * jax.random.normal(ks[4], (hidden_dim, out_dim), jnp.float32),
        "b_clf":    scale * jax.random.normal(ks[5], (1, out_dim), jnp.float32),
    }


if __name__ == "__main__":
    N, in_dim, hidden_dim, out_dim = 16, 8, 32, 8

    key = jax.random.PRNGKey(0)
    k_x, k_adj, k_p = jax.random.split(key, 3)

    # node features [N, in_dim]
    x = jax.random.normal(k_x, (N, in_dim), jnp.float32)

    # random graph -> dense 0/1 adjacency, no self loops
    adj = (jax.random.uniform(k_adj, (N, N)) < 0.3).astype(jnp.float32)
    adj = adj * (1.0 - jnp.eye(N, dtype=jnp.float32))
    deg = jnp.clip(jnp.sum(adj, axis=1, keepdims=True), 1.0, None)
    a_norm = adj / deg   # mean aggregator (for the reference)

    params = init_params(k_p, in_dim, hidden_dim, out_dim)

    fwd = jax.jit(sagenet_forward, static_argnames=("out_dim",))
    out = fwd(adj, x, params, out_dim=out_dim)
    out = jax.block_until_ready(out)

    assert out.shape == (N, out_dim)
    # rows of log_softmax should sum (in prob space) to ~1
    assert bool(jnp.all(jnp.abs(jnp.sum(jnp.exp(out), axis=1) - 1.0) < 1e-3))
    # agree with pure-JAX f32 reference (loose tol: bf16 MXU inputs, f32 accumulation)
    ref = reference_forward(a_norm, x, params)
    assert bool(jnp.max(jnp.abs(out - ref)) < 0.1)

    print("KERNEL_OK")
</pallas_src>

<mosaic_0001>
module attributes {stable_mosaic.version = 11 : i64} {
  func.func @_proj_kernel(%arg0: i32, %arg1: i32, %arg2: memref<128x128xbf16, #tpu.memory_space<vmem>>, %arg3: memref<128x256xbf16, #tpu.memory_space<vmem>>, %arg4: memref<128x256xbf16, #tpu.memory_space<vmem>>, %arg5: memref<128x256xf32, #tpu.memory_space<vmem>>) attributes {dimension_semantics = [#tpu.dimension_semantics<parallel>, #tpu.dimension_semantics<arbitrary>], iteration_bounds = array<i64: 1, 1>, scalar_prefetch = 0 : i64, scratch_operands = 1 : i64, tpu.core_type = #tpu.core_type<tc>, window_params = [{transform_indices = @transform_0, window_bounds = array<i64: 128, 128>}, {transform_indices = @transform_1, window_bounds = array<i64: 128, 256>}, {transform_indices = @transform_2, window_bounds = array<i64: 128, 256>}]} {
    %c0_i32 = arith.constant 0 : i32
    %0 = arith.cmpi eq, %arg1, %c0_i32 : i32
    %1 = arith.extui %0 : i1 to i32
    %c0_i32_0 = arith.constant 0 : i32
    %2 = arith.cmpi ne, %1, %c0_i32_0 : i32
    scf.if %2 {
      %cst_10 = arith.constant 0.000000e+00 : f32
      %12 = vector.broadcast %cst_10 : f32 to vector<128x256xf32>
      %c0_11 = arith.constant 0 : index
      %c0_12 = arith.constant 0 : index
      %13 = vector.load %arg5[%c0_11, %c0_12] : memref<128x256xf32, #tpu.memory_space<vmem>>, vector<128x256xf32>
      tpu.vector_store %arg5[%c0_11, %c0_12], %12 {strides = array<i32>} : memref<128x256xf32, #tpu.memory_space<vmem>>, vector<128x256xf32>,
    } else {
    }
    %c0 = arith.constant 0 : index
    %c0_1 = arith.constant 0 : index
    %3 = vector.load %arg5[%c0, %c0_1] : memref<128x256xf32, #tpu.memory_space<vmem>>, vector<128x256xf32>
    %c0_2 = arith.constant 0 : index
    %c0_3 = arith.constant 0 : index
    %4 = vector.load %arg2[%c0_2, %c0_3] : memref<128x128xbf16, #tpu.memory_space<vmem>>, vector<128x128xbf16>
    %c0_4 = arith.constant 0 : index
    %c0_5 = arith.constant 0 : index
    %5 = vector.load %arg3[%c0_4, %c0_5] : memref<128x256xbf16, #tpu.memory_space<vmem>>, vector<128x256xbf16>
    %cst = arith.constant dense<0.000000e+00> : vector<128x256xf32>
    %6 = tpu.matmul %4, %5, %cst {dimension_numbers = #tpu.dot_dimension_numbers<[1], [0], [0], [1], [0, 0, 1, 1], [], []>} : vector<128x128xbf16>, vector<128x256xbf16>, vector<128x256xf32> -> vector<128x256xf32>
    %7 = arith.addf %3, %6 : vector<128x256xf32>
    %c0_6 = arith.constant 0 : index
    %c0_7 = arith.constant 0 : index
    %8 = vector.load %arg5[%c0_6, %c0_7] : memref<128x256xf32, #tpu.memory_space<vmem>>, vector<128x256xf32>
    tpu.vector_store %arg5[%c0_6, %c0_7], %7 {strides = array<i32>} : memref<128x256xf32, #tpu.memory_space<vmem>>, vector<128x256xf32>,
    %c0_i32_8 = arith.constant 0 : i32
    %9 = arith.cmpi eq, %arg1, %c0_i32_8 : i32
    %10 = arith.extui %9 : i1 to i32
    %c0_i32_9 = arith.constant 0 : i32
    %11 = arith.cmpi ne, %10, %c0_i32_9 : i32
    scf.if %11 {
      %c0_10 = arith.constant 0 : index
      %c0_11 = arith.constant 0 : index
      %12 = vector.load %arg5[%c0_10, %c0_11] : memref<128x256xf32, #tpu.memory_space<vmem>>, vector<128x256xf32>
      %13 = arith.truncf %12 : vector<128x256xf32> to vector<128x256xbf16>
      %c0_12 = arith.constant 0 : index
      %c0_13 = arith.constant 0 : index
      %14 = vector.load %arg4[%c0_12, %c0_13] : memref<128x256xbf16, #tpu.memory_space<vmem>>, vector<128x256xbf16>
      tpu.vector_store %arg4[%c0_12, %c0_13], %13 {strides = array<i32>} : memref<128x256xbf16, #tpu.memory_space<vmem>>, vector<128x256xbf16>,
    } else {
    }
    return
  }
  func.func @transform_0(%arg0: i32, %arg1: i32) -> (i32, i32) {
    %c0_i32 = arith.constant 0 : i32
    return %arg0, %arg1 : i32, i32
  }
  func.func @transform_1(%arg0: i32, %arg1: i32) -> (i32, i32) {
    %c0_i32 = arith.constant 0 : i32
    %c0_i32_0 = arith.constant 0 : i32
    return %arg1, %c0_i32 : i32, i32
  }
  func.func @transform_2(%arg0: i32, %arg1: i32) -> (i32, i32) {
    %c0_i32 = arith.constant 0 : i32
    %c0_i32_0 = arith.constant 0 : i32
    return %arg0, %c0_i32 : i32, i32
  }
}

module attributes {stable_mosaic.version = 11 : i64} {
  func.func @_agg_kernel(%arg0: i32, %arg1: i32, %arg2: memref<128x128xbf16, #tpu.memory_space<vmem>>, %arg3: memref<128x128xbf16, #tpu.memory_space<vmem>>, %arg4: memref<128x128xbf16, #tpu.memory_space<vmem>>, %arg5: memref<128x1xf32, #tpu.memory_space<vmem>>, %arg6: memref<1x128xf32, #tpu.memory_space<vmem>>, %arg7: memref<128x128xbf16, #tpu.memory_space<vmem>>, %arg8: memref<128x128xf32, #tpu.memory_space<vmem>>) attributes {dimension_semantics = [#tpu.dimension_semantics<parallel>, #tpu.dimension_semantics<arbitrary>], iteration_bounds = array<i64: 1, 1>, scalar_prefetch = 0 : i64, scratch_operands = 1 : i64, tpu.core_type = #tpu.core_type<tc>, window_params = [{transform_indices = @transform_0, window_bounds = array<i64: 128, 128>}, {transform_indices = @transform_1, window_bounds = array<i64: 128, 128>}, {transform_indices = @transform_2, window_bounds = array<i64: 128, 128>}, {transform_indices = @transform_3, window_bounds = array<i64: 128, 1>}, {pipeline_mode = #tpu.pipeline_mode<synchronous>, transform_indices = @transform_4, window_bounds = array<i64: 1, 128>}, {transform_indices = @transform_5, window_bounds = array<i64: 128, 128>}]} {
    %c0_i32 = arith.constant 0 : i32
    %0 = arith.cmpi eq, %arg1, %c0_i32 : i32
    %1 = arith.extui %0 : i1 to i32
    %c0_i32_0 = arith.constant 0 : i32
    %2 = arith.cmpi ne, %1, %c0_i32_0 : i32
    scf.if %2 {
      %cst_10 = arith.constant 0.000000e+00 : f32
      %12 = vector.broadcast %cst_10 : f32 to vector<128x128xf32>
      %c0_11 = arith.constant 0 : index
      %c0_12 = arith.constant 0 : index
      %13 = vector.load %arg8[%c0_11, %c0_12] : memref<128x128xf32, #tpu.memory_space<vmem>>, vector<128x128xf32>
      tpu.vector_store %arg8[%c0_11, %c0_12], %12 {strides = array<i32>} : memref<128x128xf32, #tpu.memory_space<vmem>>, vector<128x128xf32>,
    } else {
    }
    %c0 = arith.constant 0 : index
    %c0_1 = arith.constant 0 : index
    %3 = vector.load %arg8[%c0, %c0_1] : memref<128x128xf32, #tpu.memory_space<vmem>>, vector<128x128xf32>
    %c0_2 = arith.constant 0 : index
    %c0_3 = arith.constant 0 : index
    %4 = vector.load %arg2[%c0_2, %c0_3] : memref<128x128xbf16, #tpu.memory_space<vmem>>, vector<128x128xbf16>
    %c0_4 = arith.constant 0 : index
    %c0_5 = arith.constant 0 : index
    %5 = vector.load %arg3[%c0_4, %c0_5] : memref<128x128xbf16, #tpu.memory_space<vmem>>, vector<128x128xbf16>
    %cst = arith.constant dense<0.000000e+00> : vector<128x128xf32>
    %6 = tpu.matmul %4, %5, %cst {dimension_numbers = #tpu.dot_dimension_numbers<[1], [0], [0], [1], [0, 0, 1, 1], [], []>} : vector<128x128xbf16>, vector<128x128xbf16>, vector<128x128xf32> -> vector<128x128xf32>
    %7 = arith.addf %3, %6 : vector<128x128xf32>
    %c0_6 = arith.constant 0 : index
    %c0_7 = arith.constant 0 : index
    %8 = vector.load %arg8[%c0_6, %c0_7] : memref<128x128xf32, #tpu.memory_space<vmem>>, vector<128x128xf32>
    tpu.vector_store %arg8[%c0_6, %c0_7], %7 {strides = array<i32>} : memref<128x128xf32, #tpu.memory_space<vmem>>, vector<128x128xf32>,
    %c0_i32_8 = arith.constant 0 : i32
    %9 = arith.cmpi eq, %arg1, %c0_i32_8 : i32
    %10 = arith.extui %9 : i1 to i32
    %c0_i32_9 = arith.constant 0 : i32
    %11 = arith.cmpi ne, %10, %c0_i32_9 : i32
    scf.if %11 {
      %c0_10 = arith.constant 0 : index
      %c0_11 = arith.constant 0 : index
      %12 = vector.load %arg4[%c0_10, %c0_11] : memref<128x128xbf16, #tpu.memory_space<vmem>>, vector<128x128xbf16>
      %13 = arith.extf %12 : vector<128x128xbf16> to vector<128x128xf32>
      %c0_12 = arith.constant 0 : index
      %c0_13 = arith.constant 0 : index
      %14 = vector.load %arg5[%c0_12, %c0_13] : memref<128x1xf32, #tpu.memory_space<vmem>>, vector<128x1xf32>
      %c0_14 = arith.constant 0 : index
      %c0_15 = arith.constant 0 : index
      %15 = vector.load %arg8[%c0_14, %c0_15] : memref<128x128xf32, #tpu.memory_space<vmem>>, vector<128x128xf32>
      %16 = vector.broadcast %14 : vector<128x1xf32> to vector<128x128xf32>
      %17 = arith.mulf %16, %15 : vector<128x128xf32>
      %18 = arith.addf %13, %17 : vector<128x128xf32>
      %c0_16 = arith.constant 0 : index
      %c0_17 = arith.constant 0 : index
      %19 = vector.load %arg6[%c0_16, %c0_17] : memref<1x128xf32, #tpu.memory_space<vmem>>, vector<1x128xf32>
      %20 = vector.broadcast %19 : vector<1x128xf32> to vector<128x128xf32>
      %21 = arith.addf %18, %20 : vector<128x128xf32>
      %cst_18 = arith.constant 0.000000e+00 : f32
      %22 = vector.broadcast %cst_18 : f32 to vector<128x128xf32>
      %23 = arith.maximumf %21, %22 : vector<128x128xf32>
      %24 = arith.truncf %23 : vector<128x128xf32> to vector<128x128xbf16>
      %c0_19 = arith.constant 0 : index
      %c0_20 = arith.constant 0 : index
      %25 = vector.load %arg7[%c0_19, %c0_20] : memref<128x128xbf16, #tpu.memory_space<vmem>>, vector<128x128xbf16>
      tpu.vector_store %arg7[%c0_19, %c0_20], %24 {strides = array<i32>} : memref<128x128xbf16, #tpu.memory_space<vmem>>, vector<128x128xbf16>,
    } else {
    }
    return
  }
  func.func @transform_0(%arg0: i32, %arg1: i32) -> (i32, i32) {
    %c0_i32 = arith.constant 0 : i32
    return %arg0, %arg1 : i32, i32
  }
  func.func @transform_1(%arg0: i32, %arg1: i32) -> (i32, i32) {
    %c1_i32 = arith.constant 1 : i32
    %c0_i32 = arith.constant 0 : i32
    return %arg1, %c1_i32 : i32, i32
  }
  func.func @transform_2(%arg0: i32, %arg1: i32) -> (i32, i32) {
    %c0_i32 = arith.constant 0 : i32
    %c0_i32_0 = arith.constant 0 : i32
    return %arg0, %c0_i32 : i32, i32
  }
  func.func @transform_3(%arg0: i32, %arg1: i32) -> (i32, i32) {
    %c0_i32 = arith.constant 0 : i32
    %c0_i32_0 = arith.constant 0 : i32
    return %arg0, %c0_i32 : i32, i32
  }
  func.func @transform_4(%arg0: i32, %arg1: i32) -> (i32, i32) {
    %c0_i32 = arith.constant 0 : i32
    %c0_i32_0 = arith.constant 0 : i32
    %c0_i32_1 = arith.constant 0 : i32
    return %c0_i32, %c0_i32_0 : i32, i32
  }
  func.func @transform_5(%arg0: i32, %arg1: i32) -> (i32, i32) {
    %c0_i32 = arith.constant 0 : i32
    %c0_i32_0 = arith.constant 0 : i32
    return %arg0, %c0_i32 : i32, i32
  }
}

module attributes {stable_mosaic.version = 11 : i64} {
  func.func @_agg_clf_kernel(%arg0: i32, %arg1: i32, %arg2: memref<128x128xbf16, #tpu.memory_space<vmem>>, %arg3: memref<128x128xbf16, #tpu.memory_space<vmem>>, %arg4: memref<128x128xbf16, #tpu.memory_space<vmem>>, %arg5: memref<128x1xf32, #tpu.memory_space<vmem>>, %arg6: memref<1x128xf32, #tpu.memory_space<vmem>>, %arg7: memref<128x128xbf16, #tpu.memory_space<vmem>>, %arg8: memref<1x128xf32, #tpu.memory_space<vmem>>, %arg9: memref<128x128xf32, #tpu.memory_space<vmem>>, %arg10: memref<128x128xf32, #tpu.memory_space<vmem>>) attributes {dimension_semantics = [#tpu.dimension_semantics<parallel>, #tpu.dimension_semantics<arbitrary>], iteration_bounds = array<i64: 1, 1>, scalar_prefetch = 0 : i64, scratch_operands = 1 : i64, tpu.core_type = #tpu.core_type<tc>, window_params = [{transform_indices = @transform_0, window_bounds = array<i64: 128, 128>}, {transform_indices = @transform_1, window_bounds = array<i64: 128, 128>}, {transform_indices = @transform_2, window_bounds = array<i64: 128, 128>}, {transform_indices = @transform_3, window_bounds = array<i64: 128, 1>}, {pipeline_mode = #tpu.pipeline_mode<synchronous>, transform_indices = @transform_4, window_bounds = array<i64: 1, 128>}, {pipeline_mode = #tpu.pipeline_mode<synchronous>, transform_indices = @transform_5, window_bounds = array<i64: 128, 128>}, {pipeline_mode = #tpu.pipeline_mode<synchronous>, transform_indices = @transform_6, window_bounds = array<i64: 1, 128>}, {transform_indices = @transform_7, window_bounds = array<i64: 128, 128>}]} {
    %c0_i32 = arith.constant 0 : i32
    %0 = arith.cmpi eq, %arg1, %c0_i32 : i32
    %1 = arith.extui %0 : i1 to i32
    %c0_i32_0 = arith.constant 0 : i32
    %2 = arith.cmpi ne, %1, %c0_i32_0 : i32
    scf.if %2 {
      %cst_10 = arith.constant 0.000000e+00 : f32
      %12 = vector.broadcast %cst_10 : f32 to vector<128x128xf32>
      %c0_11 = arith.constant 0 : index
      %c0_12 = arith.constant 0 : index
      %13 = vector.load %arg10[%c0_11, %c0_12] : memref<128x128xf32, #tpu.memory_space<vmem>>, vector<128x128xf32>
      tpu.vector_store %arg10[%c0_11, %c0_12], %12 {strides = array<i32>} : memref<128x128xf32, #tpu.memory_space<vmem>>, vector<128x128xf32>,
    } else {
    }
    %c0 = arith.constant 0 : index
    %c0_1 = arith.constant 0 : index
    %3 = vector.load %arg10[%c0, %c0_1] : memref<128x128xf32, #tpu.memory_space<vmem>>, vector<128x128xf32>
    %c0_2 = arith.constant 0 : index
    %c0_3 = arith.constant 0 : index
    %4 = vector.load %arg2[%c0_2, %c0_3] : memref<128x128xbf16, #tpu.memory_space<vmem>>, vector<128x128xbf16>
    %c0_4 = arith.constant 0 : index
    %c0_5 = arith.constant 0 : index
    %5 = vector.load %arg3[%c0_4, %c0_5] : memref<128x128xbf16, #tpu.memory_space<vmem>>, vector<128x128xbf16>
    %cst = arith.constant dense<0.000000e+00> : vector<128x128xf32>
    %6 = tpu.matmul %4, %5, %cst {dimension_numbers = #tpu.dot_dimension_numbers<[1], [0], [0], [1], [0, 0, 1, 1], [], []>} : vector<128x128xbf16>, vector<128x128xbf16>, vector<128x128xf32> -> vector<128x128xf32>
    %7 = arith.addf %3, %6 : vector<128x128xf32>
    %c0_6 = arith.constant 0 : index
    %c0_7 = arith.constant 0 : index
    %8 = vector.load %arg10[%c0_6, %c0_7] : memref<128x128xf32, #tpu.memory_space<vmem>>, vector<128x128xf32>
    tpu.vector_store %arg10[%c0_6, %c0_7], %7 {strides = array<i32>} : memref<128x128xf32, #tpu.memory_space<vmem>>, vector<128x128xf32>,
    %c0_i32_8 = arith.constant 0 : i32
    %9 = arith.cmpi eq, %arg1, %c0_i32_8 : i32
    %10 = arith.extui %9 : i1 to i32
    %c0_i32_9 = arith.constant 0 : i32
    %11 = arith.cmpi ne, %10, %c0_i32_9 : i32
    scf.if %11 {
      %c0_10 = arith.constant 0 : index
      %c0_11 = arith.constant 0 : index
      %12 = vector.load %arg4[%c0_10, %c0_11] : memref<128x128xbf16, #tpu.memory_space<vmem>>, vector<128x128xbf16>
      %13 = arith.extf %12 : vector<128x128xbf16> to vector<128x128xf32>
      %c0_12 = arith.constant 0 : index
      %c0_13 = arith.constant 0 : index
      %14 = vector.load %arg5[%c0_12, %c0_13] : memref<128x1xf32, #tpu.memory_space<vmem>>, vector<128x1xf32>
      %c0_14 = arith.constant 0 : index
      %c0_15 = arith.constant 0 : index
      %15 = vector.load %arg10[%c0_14, %c0_15] : memref<128x128xf32, #tpu.memory_space<vmem>>, vector<128x128xf32>
      %16 = vector.broadcast %14 : vector<128x1xf32> to vector<128x128xf32>
      %17 = arith.mulf %16, %15 : vector<128x128xf32>
      %18 = arith.addf %13, %17 : vector<128x128xf32>
      %c0_16 = arith.constant 0 : index
      %c0_17 = arith.constant 0 : index
      %19 = vector.load %arg6[%c0_16, %c0_17] : memref<1x128xf32, #tpu.memory_space<vmem>>, vector<1x128xf32>
      %20 = vector.broadcast %19 : vector<1x128xf32> to vector<128x128xf32>
      %21 = arith.addf %18, %20 : vector<128x128xf32>
      %cst_18 = arith.constant 0.000000e+00 : f32
      %22 = vector.broadcast %cst_18 : f32 to vector<128x128xf32>
      %23 = arith.maximumf %21, %22 : vector<128x128xf32>
      %24 = arith.truncf %23 : vector<128x128xf32> to vector<128x128xbf16>
      %c0_19 = arith.constant 0 : index
      %c0_20 = arith.constant 0 : index
      %25 = vector.load %arg7[%c0_19, %c0_20] : memref<128x128xbf16, #tpu.memory_space<vmem>>, vector<128x128xbf16>
      %cst_21 = arith.constant dense<0.000000e+00> : vector<128x128xf32>
      %26 = tpu.matmul %24, %25, %cst_21 {dimension_numbers = #tpu.dot_dimension_numbers<[1], [0], [0], [1], [0, 0, 1, 1], [], []>} : vector<128x128xbf16>, vector<128x128xbf16>, vector<128x128xf32> -> vector<128x128xf32>
      %c0_22 = arith.constant 0 : index
      %c0_23 = arith.constant 0 : index
      %27 = vector.load %arg8[%c0_22, %c0_23] : memref<1x128xf32, #tpu.memory_space<vmem>>, vector<1x128xf32>
      %28 = vector.broadcast %27 : vector<1x128xf32> to vector<128x128xf32>
      %29 = arith.addf %26, %28 : vector<128x128xf32>
      %30 = tpu.iota {dimensions = array<i32: 1>} : vector<128x128xi32>
      %c8_i32 = arith.constant 8 : i32
      %31 = vector.broadcast %c8_i32 : i32 to vector<128x128xi32>
      %32 = arith.cmpi slt, %30, %31 : vector<128x128xi32>
      %cst_24 = arith.constant -1.000000e+30 : f32
      %33 = vector.broadcast %cst_24 : f32 to vector<128x128xf32>
      %34 = arith.select %32, %29, %33 : vector<128x128xi1>, vector<128x128xf32>
      %cst_25 = arith.constant dense<0xFF800000> : vector<128xf32>
      %35 = vector.multi_reduction <maximumf>, %34, %cst_25 [1] : vector<128x128xf32> to vector<128xf32>
      %36 = vector.shape_cast %35 : vector<128xf32> to vector<128x1xf32>
      %37 = vector.broadcast %36 : vector<128x1xf32> to vector<128x128xf32>
      %38 = arith.subf %34, %37 : vector<128x128xf32>
      %39 = math.exp %38 : vector<128x128xf32>
      %cst_26 = arith.constant dense<0.000000e+00> : vector<128xf32>
      %40 = vector.multi_reduction <add>, %39, %cst_26 [1] : vector<128x128xf32> to vector<128xf32>
      %41 = vector.shape_cast %40 : vector<128xf32> to vector<128x1xf32>
      %42 = math.log %41 : vector<128x1xf32>
      %43 = vector.broadcast %42 : vector<128x1xf32> to vector<128x128xf32>
      %44 = arith.subf %38, %43 : vector<128x128xf32>
      %c0_27 = arith.constant 0 : index
      %c0_28 = arith.constant 0 : index
      %45 = vector.load %arg9[%c0_27, %c0_28] : memref<128x128xf32, #tpu.memory_space<vmem>>, vector<128x128xf32>
      tpu.vector_store %arg9[%c0_27, %c0_28], %44 {strides = array<i32>} : memref<128x128xf32, #tpu.memory_space<vmem>>, vector<128x128xf32>,
    } else {
    }
    return
  }
  func.func @transform_0(%arg0: i32, %arg1: i32) -> (i32, i32) {
    %c0_i32 = arith.constant 0 : i32
    return %arg0, %arg1 : i32, i32
  }
  func.func @transform_1(%arg0: i32, %arg1: i32) -> (i32, i32) {
    %c1_i32 = arith.constant 1 : i32
    %c0_i32 = arith.constant 0 : i32
    return %arg1, %c1_i32 : i32, i32
  }
  func.func @transform_2(%arg0: i32, %arg1: i32) -> (i32, i32) {
    %c0_i32 = arith.constant 0 : i32
    %c0_i32_0 = arith.constant 0 : i32
    return %arg0, %c0_i32 : i32, i32
  }
  func.func @transform_3(%arg0: i32, %arg1: i32) -> (i32, i32) {
    %c0_i32 = arith.constant 0 : i32
    %c0_i32_0 = arith.constant 0 : i32
    return %arg0, %c0_i32 : i32, i32
  }
  func.func @transform_4(%arg0: i32, %arg1: i32) -> (i32, i32) {
    %c0_i32 = arith.constant 0 : i32
    %c0_i32_0 = arith.constant 0 : i32
    %c0_i32_1 = arith.constant 0 : i32
    return %c0_i32, %c0_i32_0 : i32, i32
  }
  func.func @transform_5(%arg0: i32, %arg1: i32) -> (i32, i32) {
    %c0_i32 = arith.constant 0 : i32
    %c0_i32_0 = arith.constant 0 : i32
    %c0_i32_1 = arith.constant 0 : i32
    return %c0_i32, %c0_i32_0 : i32, i32
  }
  func.func @transform_6(%arg0: i32, %arg1: i32) -> (i32, i32) {
    %c0_i32 = arith.constant 0 : i32
    %c0_i32_0 = arith.constant 0 : i32
    %c0_i32_1 = arith.constant 0 : i32
    return %c0_i32, %c0_i32_0 : i32, i32
  }
  func.func @transform_7(%arg0: i32, %arg1: i32) -> (i32, i32) {
    %c0_i32 = arith.constant 0 : i32
    %c0_i32_0 = arith.constant 0 : i32
    return %arg0, %c0_i32 : i32, i32
  }
}

</mosaic_0001>

<llo_original>
// kernel: sagenet_forward.4
$region0: #{sagenet_forward.4}
  #allocation0 [shape = 'u32[]', space=smem, size = 0x4, offset = 0x4, fixed_abs, tag = 'smem constant byte address 0x4 - core index']
  #allocation1 [shape = 'u32[72,128]{1,0:T(1,128)}', space=vmem, size = 0x9000, scoped, tag = 'internal scratch']
  #allocation2 [shape = 'f32[128,256]{1,0:T(8,128)}', space=vmem, size = 0x20000, scoped, tag = 'scratch operand']
  %s0 = inlined_call_operand.vmem [shape: bf16[128,128], index: 0, kind: input, shape index: {}]
  %s1 = inlined_call_operand.vmem [shape: bf16[128,256], index: 1, kind: input, shape index: {}]
  %s2 = inlined_call_operand.vmem [shape: bf16[128,256], index: 2, kind: output, shape index: {}]
  %s3 = sld [smem:[#allocation0]]
  $region26: #{sagenet_forward.4} parent=0
    _
  %s5 = ssub.s32 1, %s3
  %s6 = scalar_select 0, %s5, %s3
  // Predicated region
  $region2: #{sagenet_forward.4} parent=0 // pred_check
    _
  $region3: #{sagenet_forward.4} parent=0 // pred_check_branch
    %8 = sbr.rel (0) target = $region5
  $region4: #{sagenet_forward.4} parent=0 // pred_region
    _
  $region5: #{sagenet_forward.4} parent=0 // pred_fallthru
    _
  // Predicated region
  $region6: #{sagenet_forward.4} parent=0 // pred_check
    _
  $region7: #{sagenet_forward.4} parent=0 // pred_check_branch
    %10 = sbr.rel (0) target = $region9
  $region8: #{sagenet_forward.4} parent=0 // pred_region
    _
  $region9: #{sagenet_forward.4} parent=0 // pred_fallthru
    _
  %p11 = scmp.eq.s32.totalorder 0, 0
  // Predicated region
  $region10: #{sagenet_forward.4} parent=0 // pred_check
    %p12 = pneg %p11
  $region11: #{sagenet_forward.4} parent=0 // pred_check_branch
    %14 = sbr.rel (%p12) target = $region13
  $region12: #{sagenet_forward.4} parent=0 // pred_region
    %15 = vst [vmem:[#allocation2] sm:$0xff] 0.0
    %16 = vst [vmem:[#allocation2 + $0x8] sm:$0xff] 0.0
    %17 = vst [vmem:[#allocation2 + $0x10] sm:$0xff] 0.0
    %18 = vst [vmem:[#allocation2 + $0x18] sm:$0xff] 0.0
    %19 = vst [vmem:[#allocation2 + $0x20] sm:$0xff] 0.0
    %20 = vst [vmem:[#allocation2 + $0x28] sm:$0xff] 0.0
    %21 = vst [vmem:[#allocation2 + $0x30] sm:$0xff] 0.0
    %22 = vst [vmem:[#allocation2 + $0x38] sm:$0xff] 0.0
    %23 = vst [vmem:[#allocation2 + $0x40] sm:$0xff] 0.0
    %24 = vst [vmem:[#allocation2 + $0x48] sm:$0xff] 0.0
    %25 = vst [vmem:[#allocation2 + $0x50] sm:$0xff] 0.0
    %26 = vst [vmem:[#allocation2 + $0x58] sm:$0xff] 0.0
    %27 = vst [vmem:[#allocation2 + $0x60] sm:$0xff] 0.0
    %28 = vst [vmem:[#allocation2 + $0x68] sm:$0xff] 0.0
    %29 = vst [vmem:[#allocation2 + $0x70] sm:$0xff] 0.0
    %30 = vst [vmem:[#allocation2 + $0x78] sm:$0xff] 0.0
    %31 = vst [vmem:[#allocation2 + $0x80] sm:$0xff] 0.0
    %32 = vst [vmem:[#allocation2 + $0x88] sm:$0xff] 0.0
    %33 = vst [vmem:[#allocation2 + $0x90] sm:$0xff] 0.0
    %34 = vst [vmem:[#allocation2 + $0x98] sm:$0xff] 0.0
    %35 = vst [vmem:[#allocation2 + $0xa0] sm:$0xff] 0.0
    %36 = vst [vmem:[#allocation2 + $0xa8] sm:$0xff] 0.0
    %37 = vst [vmem:[#allocation2 + $0xb0] sm:$0xff] 0.0
    %38 = vst [vmem:[#allocation2 + $0xb8] sm:$0xff] 0.0
    %39 = vst [vmem:[#allocation2 + $0xc0] sm:$0xff] 0.0
    %40 = vst [vmem:[#allocation2 + $0xc8] sm:$0xff] 0.0
    %41 = vst [vmem:[#allocation2 + $0xd0] sm:$0xff] 0.0
    %42 = vst [vmem:[#allocation2 + $0xd8] sm:$0xff] 0.0
    %43 = vst [vmem:[#allocation2 + $0xe0] sm:$0xff] 0.0
    %44 = vst [vmem:[#allocation2 + $0xe8] sm:$0xff] 0.0
    %45 = vst [vmem:[#allocation2 + $0xf0] sm:$0xff] 0.0
    %46 = vst [vmem:[#allocation2 + $0xf8] sm:$0xff] 0.0
  $region13: #{sagenet_forward.4} parent=0 // pred_fallthru
    _
  %v47 = vld [vmem:[#allocation2] sm:$0xff]
  %v48 = vld [vmem:[#allocation2 + $0x8] sm:$0xff]
  %v49 = vld [vmem:[#allocation2 + $0x10] sm:$0xff]
  %v50 = vld [vmem:[#allocation2 + $0x18] sm:$0xff]
  %v51 = vld [vmem:[#allocation2 + $0x20] sm:$0xff]
  %v52 = vld [vmem:[#allocation2 + $0x28] sm:$0xff]
  %v53 = vld [vmem:[#allocation2 + $0x30] sm:$0xff]
  %v54 = vld [vmem:[#allocation2 + $0x38] sm:$0xff]
  %v55 = vld [vmem:[#allocation2 + $0x40] sm:$0xff]
  %v56 = vld [vmem:[#allocation2 + $0x48] sm:$0xff]
  %v57 = vld [vmem:[#allocation2 + $0x50] sm:$0xff]
  %v58 = vld [vmem:[#allocation2 + $0x58] sm:$0xff]
  %v59 = vld [vmem:[#allocation2 + $0x60] sm:$0xff]
  %v60 = vld [vmem:[#allocation2 + $0x68] sm:$0xff]
  %v61 = vld [vmem:[#allocation2 + $0x70] sm:$0xff]
  %v62 = vld [vmem:[#allocation2 + $0x78] sm:$0xff]
  %v63 = vld [vmem:[#allocation2 + $0x80] sm:$0xff]
  %v64 = vld [vmem:[#allocation2 + $0x88] sm:$0xff]
  %v65 = vld [vmem:[#allocation2 + $0x90] sm:$0xff]
  %v66 = vld [vmem:[#allocation2 + $0x98] sm:$0xff]
  %v67 = vld [vmem:[#allocation2 + $0xa0] sm:$0xff]
  %v68 = vld [vmem:[#allocation2 + $0xa8] sm:$0xff]
  %v69 = vld [vmem:[#allocation2 + $0xb0] sm:$0xff]
  %v70 = vld [vmem:[#allocation2 + $0xb8] sm:$0xff]
  %v71 = vld [vmem:[#allocation2 + $0xc0] sm:$0xff]
  %v72 = vld [vmem:[#allocation2 + $0xc8] sm:$0xff]
  %v73 = vld [vmem:[#allocation2 + $0xd0] sm:$0xff]
  %v74 = vld [vmem:[#allocation2 + $0xd8] sm:$0xff]
  %v75 = vld [vmem:[#allocation2 + $0xe0] sm:$0xff]
  %v76 = vld [vmem:[#allocation2 + $0xe8] sm:$0xff]
  %v77 = vld [vmem:[#allocation2 + $0xf0] sm:$0xff]
  %v78 = vld [vmem:[#allocation2 + $0xf8] sm:$0xff]
  %v79 = vld [vmem:[%s0] sm:$0xf]
  %v80 = vld [vmem:[%s0 + $0x4] sm:$0xf]
  %v81 = vld [vmem:[%s0 + $0x8] sm:$0xf]
  %v82 = vld [vmem:[%s0 + $0xc] sm:$0xf]
  %v83 = vld [vmem:[%s0 + $0x10] sm:$0xf]
  %v84 = vld [vmem:[%s0 + $0x14] sm:$0xf]
  %v85 = vld [vmem:[%s0 + $0x18] sm:$0xf]
  %v86 = vld [vmem:[%s0 + $0x1c] sm:$0xf]
  %v87 = vld [vmem:[%s0 + $0x20] sm:$0xf]
  %v88 = vld [vmem:[%s0 + $0x24] sm:$0xf]
  %v89 = vld [vmem:[%s0 + $0x28] sm:$0xf]
  %v90 = vld [vmem:[%s0 + $0x2c] sm:$0xf]
  %v91 = vld [vmem:[%s0 + $0x30] sm:$0xf]
  %v92 = vld [vmem:[%s0 + $0x34] sm:$0xf]
  %v93 = vld [vmem:[%s0 + $0x38] sm:$0xf]
  %v94 = vld [vmem:[%s0 + $0x3c] sm:$0xf]
  %v95 = vld [vmem:[%s1] sm:$0xff]
  %v96 = vld [vmem:[%s1 + $0x8] sm:$0xff]
  %v97 = vld [vmem:[%s1 + $0x10] sm:$0xff]
  %v98 = vld [vmem:[%s1 + $0x18] sm:$0xff]
  %v99 = vld [vmem:[%s1 + $0x20] sm:$0xff]
  %v100 = vld [vmem:[%s1 + $0x28] sm:$0xff]
  %v101 = vld [vmem:[%s1 + $0x30] sm:$0xff]
  %v102 = vld [vmem:[%s1 + $0x38] sm:$0xff]
  %v103 = vld [vmem:[%s1 + $0x40] sm:$0xff]
  %v104 = vld [vmem:[%s1 + $0x48] sm:$0xff]
  %v105 = vld [vmem:[%s1 + $0x50] sm:$0xff]
  %v106 = vld [vmem:[%s1 + $0x58] sm:$0xff]
  %v107 = vld [vmem:[%s1 + $0x60] sm:$0xff]
  %v108 = vld [vmem:[%s1 + $0x68] sm:$0xff]
  %v109 = vld [vmem:[%s1 + $0x70] sm:$0xff]
  %v110 = vld [vmem:[%s1 + $0x78] sm:$0xff]
  %v127 = vunpack.c.l.b16 %v79
  %v128 = vunpack.c.l.b16 %v80
  %v129 = vunpack.c.l.b16 %v81
  %v130 = vunpack.c.l.b16 %v82
  %v131 = vunpack.c.l.b16 %v83
  %v132 = vunpack.c.l.b16 %v84
  %v133 = vunpack.c.l.b16 %v85
  %v134 = vunpack.c.l.b16 %v86
  %v135 = vunpack.c.l.b16 %v87
  %v136 = vunpack.c.l.b16 %v88
  %v137 = vunpack.c.l.b16 %v89
  %v138 = vunpack.c.l.b16 %v90
  %v139 = vunpack.c.l.b16 %v91
  %v140 = vunpack.c.l.b16 %v92
  %v141 = vunpack.c.l.b16 %v93
  %v142 = vunpack.c.l.b16 %v94
  %v143 = vpack.c.b16 %v128, %v127
  %v144 = vpack.c.b16 %v130, %v129
  %v145 = vpack.c.b16 %v132, %v131
  %v146 = vpack.c.b16 %v134, %v133
  %v147 = vpack.c.b16 %v136, %v135
  %v148 = vpack.c.b16 %v138, %v137
  %v149 = vpack.c.b16 %v140, %v139
  %v150 = vpack.c.b16 %v142, %v141
  %v175 = vunpack.c.l.b16 %v95
  %v176 = vunpack.c.h.b16 %v95
  %v177 = vunpack.c.l.b16 %v96
  %v178 = vunpack.c.h.b16 %v96
  %v179 = vunpack.c.l.b16 %v97
  %v180 = vunpack.c.h.b16 %v97
  %v181 = vunpack.c.l.b16 %v98
  %v182 = vunpack.c.h.b16 %v98
  %v183 = vunpack.c.l.b16 %v99
  %v184 = vunpack.c.h.b16 %v99
  %v185 = vunpack.c.l.b16 %v100
  %v186 = vunpack.c.h.b16 %v100
  %v187 = vunpack.c.l.b16 %v101
  %v188 = vunpack.c.h.b16 %v101
  %v189 = vunpack.c.l.b16 %v102
  %v190 = vunpack.c.h.b16 %v102
  %v191 = vunpack.c.l.b16 %v103
  %v192 = vunpack.c.h.b16 %v103
  %v193 = vunpack.c.l.b16 %v104
  %v194 = vunpack.c.h.b16 %v104
  %v195 = vunpack.c.l.b16 %v105
  %v196 = vunpack.c.h.b16 %v105
  %v197 = vunpack.c.l.b16 %v106
  %v198 = vunpack.c.h.b16 %v106
  %v199 = vunpack.c.l.b16 %v107
  %v200 = vunpack.c.h.b16 %v107
  %v201 = vunpack.c.l.b16 %v108
  %v202 = vunpack.c.h.b16 %v108
  %v203 = vunpack.c.l.b16 %v109
  %v204 = vunpack.c.h.b16 %v109
  %v205 = vunpack.c.l.b16 %v110
  %v206 = vunpack.c.h.b16 %v110
  %v207 = vpack.c.b16 %v177, %v175
  %v208 = vpack.c.b16 %v178, %v176
  %v209 = vpack.c.b16 %v181, %v179
  %v210 = vpack.c.b16 %v182, %v180
  %v211 = vpack.c.b16 %v185, %v183
  %v212 = vpack.c.b16 %v186, %v184
  %v213 = vpack.c.b16 %v189, %v187
  %v214 = vpack.c.b16 %v190, %v188
  %v215 = vpack.c.b16 %v193, %v191
  %v216 = vpack.c.b16 %v194, %v192
  %v217 = vpack.c.b16 %v197, %v195
  %v218 = vpack.c.b16 %v198, %v196
  %v219 = vpack.c.b16 %v201, %v199
  %v220 = vpack.c.b16 %v202, %v200
  %v221 = vpack.c.b16 %v205, %v203
  %v222 = vpack.c.b16 %v206, %v204
  %239 = vmatpush.bf16.msra.mxu0 %v221
  %240 = vmatpush.bf16.msra.mxu0 %v219
  %241 = vmatpush.bf16.msra.mxu0 %v217
  %242 = vmatpush.bf16.msra.mxu0 %v215
  %243 = vmatpush.bf16.msra.mxu0 %v213
  %244 = vmatpush.bf16.msra.mxu0 %v211
  %245 = vmatpush.bf16.msra.mxu0 %v209
  %246 = vmatpush.bf16.msra.mxu0 %v207
  %247 = vmatmul.bf16.gmra.mxu0 %v143
  %v248 = vpop.f32.mrf.mxu0
  %v249 = vadd.f32 0.0, %v248
  %v250 = vpop.f32.mrf.mxu0
  %v251 = vadd.f32 0.0, %v250
  %252 = vmatmul.bf16.gmra.mxu0 %v144
  %v253 = vpop.f32.mrf.mxu0
  %v254 = vadd.f32 0.0, %v253
  %v255 = vpop.f32.mrf.mxu0
  %v256 = vadd.f32 0.0, %v255
  %257 = vmatmul.bf16.gmra.mxu0 %v145
  %v258 = vpop.f32.mrf.mxu0
  %v259 = vadd.f32 0.0, %v258
  %v260 = vpop.f32.mrf.mxu0
  %v261 = vadd.f32 0.0, %v260
  %262 = vmatmul.bf16.gmra.mxu0 %v146
  %v263 = vpop.f32.mrf.mxu0
  %v264 = vadd.f32 0.0, %v263
  %v265 = vpop.f32.mrf.mxu0
  %v266 = vadd.f32 0.0, %v265
  %267 = vmatmul.bf16.gmra.mxu0 %v147
  %v268 = vpop.f32.mrf.mxu0
  %v269 = vadd.f32 0.0, %v268
  %v270 = vpop.f32.mrf.mxu0
  %v271 = vadd.f32 0.0, %v270
  %272 = vmatmul.bf16.gmra.mxu0 %v148
  %v273 = vpop.f32.mrf.mxu0
  %v274 = vadd.f32 0.0, %v273
  %v275 = vpop.f32.mrf.mxu0
  %v276 = vadd.f32 0.0, %v275
  %277 = vmatmul.bf16.gmra.mxu0 %v149
  %v278 = vpop.f32.mrf.mxu0
  %v279 = vadd.f32 0.0, %v278
  %v280 = vpop.f32.mrf.mxu0
  %v281 = vadd.f32 0.0, %v280
  %282 = vmatmul.bf16.gmra.mxu0 %v150
  %v283 = vpop.f32.mrf.mxu0
  %v284 = vadd.f32 0.0, %v283
  %v285 = vpop.f32.mrf.mxu0
  %v286 = vadd.f32 0.0, %v285
  %287 = vdwg.mxu0
  %288 = vmatpush.bf16.msra.mxu0 %v222
  %289 = vmatpush.bf16.msra.mxu0 %v220
  %290 = vmatpush.bf16.msra.mxu0 %v218
  %291 = vmatpush.bf16.msra.mxu0 %v216
  %292 = vmatpush.bf16.msra.mxu0 %v214
  %293 = vmatpush.bf16.msra.mxu0 %v212
  %294 = vmatpush.bf16.msra.mxu0 %v210
  %295 = vmatpush.bf16.msra.mxu0 %v208
  %296 = vmatmul.bf16.gmra.mxu0 %v143
  %v297 = vpop.f32.mrf.mxu0
  %v298 = vadd.f32 0.0, %v297
  %v299 = vpop.f32.mrf.mxu0
  %v300 = vadd.f32 0.0, %v299
  %301 = vmatmul.bf16.gmra.mxu0 %v144
  %v302 = vpop.f32.mrf.mxu0
  %v303 = vadd.f32 0.0, %v302
  %v304 = vpop.f32.mrf.mxu0
  %v305 = vadd.f32 0.0, %v304
  %306 = vmatmul.bf16.gmra.mxu0 %v145
  %v307 = vpop.f32.mrf.mxu0
  %v308 = vadd.f32 0.0, %v307
  %v309 = vpop.f32.mrf.mxu0
  %v310 = vadd.f32 0.0, %v309
  %311 = vmatmul.bf16.gmra.mxu0 %v146
  %v312 = vpop.f32.mrf.mxu0
  %v313 = vadd.f32 0.0, %v312
  %v314 = vpop.f32.mrf.mxu0
  %v315 = vadd.f32 0.0, %v314
  %316 = vmatmul.bf16.gmra.mxu0 %v147
  %v317 = vpop.f32.mrf.mxu0
  %v318 = vadd.f32 0.0, %v317
  %v319 = vpop.f32.mrf.mxu0
  %v320 = vadd.f32 0.0, %v319
  %321 = vmatmul.bf16.gmra.mxu0 %v148
  %v322 = vpop.f32.mrf.mxu0
  %v323 = vadd.f32 0.0, %v322
  %v324 = vpop.f32.mrf.mxu0
  %v325 = vadd.f32 0.0, %v324
  %326 = vmatmul.bf16.gmra.mxu0 %v149
  %v327 = vpop.f32.mrf.mxu0
  %v328 = vadd.f32 0.0, %v327
  %v329 = vpop.f32.mrf.mxu0
  %v330 = vadd.f32 0.0, %v329
  %331 = vmatmul.bf16.gmra.mxu0 %v150
  %v332 = vpop.f32.mrf.mxu0
  %v333 = vadd.f32 0.0, %v332
  %v334 = vpop.f32.mrf.mxu0
  %v335 = vadd.f32 0.0, %v334
  %336 = vdwg.mxu0
  %v337 = vadd.f32 %v47, %v249
  %v338 = vadd.f32 %v48, %v298
  %v339 = vadd.f32 %v49, %v251
  %v340 = vadd.f32 %v50, %v300
  %v341 = vadd.f32 %v51, %v254
  %v342 = vadd.f32 %v52, %v303
  %v343 = vadd.f32 %v53, %v256
  %v344 = vadd.f32 %v54, %v305
  %v345 = vadd.f32 %v55, %v259
  %v346 = vadd.f32 %v56, %v308
  %v347 = vadd.f32 %v57, %v261
  %v348 = vadd.f32 %v58, %v310
  %v349 = vadd.f32 %v59, %v264
  %v350 = vadd.f32 %v60, %v313
  %v351 = vadd.f32 %v61, %v266
  %v352 = vadd.f32 %v62, %v315
  %v353 = vadd.f32 %v63, %v269
  %v354 = vadd.f32 %v64, %v318
  %v355 = vadd.f32 %v65, %v271
  %v356 = vadd.f32 %v66, %v320
  %v357 = vadd.f32 %v67, %v274
  %v358 = vadd.f32 %v68, %v323
  %v359 = vadd.f32 %v69, %v276
  %v360 = vadd.f32 %v70, %v325
  %v361 = vadd.f32 %v71, %v279
  %v362 = vadd.f32 %v72, %v328
  %v363 = vadd.f32 %v73, %v281
  %v364 = vadd.f32 %v74, %v330
  %v365 = vadd.f32 %v75, %v284
  %v366 = vadd.f32 %v76, %v333
  %v367 = vadd.f32 %v77, %v286
  %v368 = vadd.f32 %v78, %v335
  %369 = vst [vmem:[#allocation2] sm:$0xff] %v337
  %370 = vst [vmem:[#allocation2 + $0x8] sm:$0xff] %v338
  %371 = vst [vmem:[#allocation2 + $0x10] sm:$0xff] %v339
  %372 = vst [vmem:[#allocation2 + $0x18] sm:$0xff] %v340
  %373 = vst [vmem:[#allocation2 + $0x20] sm:$0xff] %v341
  %374 = vst [vmem:[#allocation2 + $0x28] sm:$0xff] %v342
  %375 = vst [vmem:[#allocation2 + $0x30] sm:$0xff] %v343
  %376 = vst [vmem:[#allocation2 + $0x38] sm:$0xff] %v344
  %377 = vst [vmem:[#allocation2 + $0x40] sm:$0xff] %v345
  %378 = vst [vmem:[#allocation2 + $0x48] sm:$0xff] %v346
  %379 = vst [vmem:[#allocation2 + $0x50] sm:$0xff] %v347
  %380 = vst [vmem:[#allocation2 + $0x58] sm:$0xff] %v348
  %381 = vst [vmem:[#allocation2 + $0x60] sm:$0xff] %v349
  %382 = vst [vmem:[#allocation2 + $0x68] sm:$0xff] %v350
  %383 = vst [vmem:[#allocation2 + $0x70] sm:$0xff] %v351
  %384 = vst [vmem:[#allocation2 + $0x78] sm:$0xff] %v352
  %385 = vst [vmem:[#allocation2 + $0x80] sm:$0xff] %v353
  %386 = vst [vmem:[#allocation2 + $0x88] sm:$0xff] %v354
  %387 = vst [vmem:[#allocation2 + $0x90] sm:$0xff] %v355
  %388 = vst [vmem:[#allocation2 + $0x98] sm:$0xff] %v356
  %389 = vst [vmem:[#allocation2 + $0xa0] sm:$0xff] %v357
  %390 = vst [vmem:[#allocation2 + $0xa8] sm:$0xff] %v358
  %391 = vst [vmem:[#allocation2 + $0xb0] sm:$0xff] %v359
  %392 = vst [vmem:[#allocation2 + $0xb8] sm:$0xff] %v360
  %393 = vst [vmem:[#allocation2 + $0xc0] sm:$0xff] %v361
  %394 = vst [vmem:[#allocation2 + $0xc8] sm:$0xff] %v362
  %395 = vst [vmem:[#allocation2 + $0xd0] sm:$0xff] %v363
  %396 = vst [vmem:[#allocation2 + $0xd8] sm:$0xff] %v364
  %397 = vst [vmem:[#allocation2 + $0xe0] sm:$0xff] %v365
  %398 = vst [vmem:[#allocation2 + $0xe8] sm:$0xff] %v366
  %399 = vst [vmem:[#allocation2 + $0xf0] sm:$0xff] %v367
  %400 = vst [vmem:[#allocation2 + $0xf8] sm:$0xff] %v368
  // Predicated region
  $region14: #{sagenet_forward.4} parent=0 // pred_check
    %p401 = pneg %p11
  $region15: #{sagenet_forward.4} parent=0 // pred_check_branch
    %403 = sbr.rel (%p401) target = $region17
  $region16: #{sagenet_forward.4} parent=0 // pred_region
    %v404 = vld [vmem:[#allocation2] sm:$0xff]
    %v405 = vld [vmem:[#allocation2 + $0x8] sm:$0xff]
    %v406 = vld [vmem:[#allocation2 + $0x10] sm:$0xff]
    %v407 = vld [vmem:[#allocation2 + $0x18] sm:$0xff]
    %v408 = vld [vmem:[#allocation2 + $0x20] sm:$0xff]
    %v409 = vld [vmem:[#allocation2 + $0x28] sm:$0xff]
    %v410 = vld [vmem:[#allocation2 + $0x30] sm:$0xff]
    %v411 = vld [vmem:[#allocation2 + $0x38] sm:$0xff]
    %v412 = vld [vmem:[#allocation2 + $0x40] sm:$0xff]
    %v413 = vld [vmem:[#allocation2 + $0x48] sm:$0xff]
    %v414 = vld [vmem:[#allocation2 + $0x50] sm:$0xff]
    %v415 = vld [vmem:[#allocation2 + $0x58] sm:$0xff]
    %v416 = vld [vmem:[#allocation2 + $0x60] sm:$0xff]
    %v417 = vld [vmem:[#allocation2 + $0x68] sm:$0xff]
    %v418 = vld [vmem:[#allocation2 + $0x70] sm:$0xff]
    %v419 = vld [vmem:[#allocation2 + $0x78] sm:$0xff]
    %v420 = vld [vmem:[#allocation2 + $0x80] sm:$0xff]
    %v421 = vld [vmem:[#allocation2 + $0x88] sm:$0xff]
    %v422 = vld [vmem:[#allocation2 + $0x90] sm:$0xff]
    %v423 = vld [vmem:[#allocation2 + $0x98] sm:$0xff]
    %v424 = vld [vmem:[#allocation2 + $0xa0] sm:$0xff]
    %v425 = vld [vmem:[#allocation2 + $0xa8] sm:$0xff]
    %v426 = vld [vmem:[#allocation2 + $0xb0] sm:$0xff]
    %v427 = vld [vmem:[#allocation2 + $0xb8] sm:$0xff]
    %v428 = vld [vmem:[#allocation2 + $0xc0] sm:$0xff]
    %v429 = vld [vmem:[#allocation2 + $0xc8] sm:$0xff]
    %v430 = vld [vmem:[#allocation2 + $0xd0] sm:$0xff]
    %v431 = vld [vmem:[#allocation2 + $0xd8] sm:$0xff]
    %v432 = vld [vmem:[#allocation2 + $0xe0] sm:$0xff]
    %v433 = vld [vmem:[#allocation2 + $0xe8] sm:$0xff]
    %v434 = vld [vmem:[#allocation2 + $0xf0] sm:$0xff]
    %v435 = vld [vmem:[#allocation2 + $0xf8] sm:$0xff]
    %v436 = vpack.c.bf16 %v405, %v404
    %v437 = vpack.c.bf16 %v407, %v406
    %v438 = vpack.c.bf16 %v409, %v408
    %v439 = vpack.c.bf16 %v411, %v410
    %v440 = vpack.c.bf16 %v413, %v412
    %v441 = vpack.c.bf16 %v415, %v414
    %v442 = vpack.c.bf16 %v417, %v416
    %v443 = vpack.c.bf16 %v419, %v418
    %v444 = vpack.c.bf16 %v421, %v420
    %v445 = vpack.c.bf16 %v423, %v422
    %v446 = vpack.c.bf16 %v425, %v424
    %v447 = vpack.c.bf16 %v427, %v426
    %v448 = vpack.c.bf16 %v429, %v428
    %v449 = vpack.c.bf16 %v431, %v430
    %v450 = vpack.c.bf16 %v433, %v432
    %v451 = vpack.c.bf16 %v435, %v434
    %452 = vst [vmem:[%s2] sm:$0xff] %v436
    %453 = vst [vmem:[%s2 + $0x8] sm:$0xff] %v437
    %454 = vst [vmem:[%s2 + $0x10] sm:$0xff] %v438
    %455 = vst [vmem:[%s2 + $0x18] sm:$0xff] %v439
    %456 = vst [vmem:[%s2 + $0x20] sm:$0xff] %v440
    %457 = vst [vmem:[%s2 + $0x28] sm:$0xff] %v441
    %458 = vst [vmem:[%s2 + $0x30] sm:$0xff] %v442
    %459 = vst [vmem:[%s2 + $0x38] sm:$0xff] %v443
    %460 = vst [vmem:[%s2 + $0x40] sm:$0xff] %v444
    %461 = vst [vmem:[%s2 + $0x48] sm:$0xff] %v445
    %462 = vst [vmem:[%s2 + $0x50] sm:$0xff] %v446
    %463 = vst [vmem:[%s2 + $0x58] sm:$0xff] %v447
    %464 = vst [vmem:[%s2 + $0x60] sm:$0xff] %v448
    %465 = vst [vmem:[%s2 + $0x68] sm:$0xff] %v449
    %466 = vst [vmem:[%s2 + $0x70] sm:$0xff] %v450
    %467 = vst [vmem:[%s2 + $0x78] sm:$0xff] %v451
  $region17: #{sagenet_forward.4} parent=0 // pred_fallthru
    _
  // Predicated region
  $region18: #{sagenet_forward.4} parent=0 // pred_check
    _
  $region19: #{sagenet_forward.4} parent=0 // pred_check_branch
    %469 = sbr.rel (0) target = $region21
  $region20: #{sagenet_forward.4} parent=0 // pred_region
    _
  $region21: #{sagenet_forward.4} parent=0 // pred_fallthru
    _
  // Predicated region
  $region22: #{sagenet_forward.4} parent=0 // pred_check
    _
  $region23: #{sagenet_forward.4} parent=0 // pred_check_branch
    %471 = sbr.rel (0) target = $region25
  $region24: #{sagenet_forward.4} parent=0 // pred_region
    _
  $region25: #{sagenet_forward.4} parent=0 // pred_fallthru
    _

// kernel: sagenet_forward.5
$region0: #{sagenet_forward.5}
  #allocation0 [shape = 'u32[]', space=smem, size = 0x4, offset = 0x4, fixed_abs, tag = 'smem constant byte address 0x4 - core index']
  #allocation1 [shape = 'u32[72,128]{1,0:T(1,128)}', space=vmem, size = 0x9000, scoped, tag = 'internal scratch']
  #allocation2 [shape = 'f32[128,128]{1,0:T(8,128)}', space=vmem, size = 0x10000, scoped, tag = 'scratch operand']
  %s0 = inlined_call_operand.vmem [shape: bf16[128,128], index: 0, kind: input, shape index: {}]
  %s1 = inlined_call_operand.vmem [shape: bf16[128,256], index: 1, kind: input, shape index: {}, may-alias: {1,2}]
  %s2 = inlined_call_operand.vmem [shape: bf16[128,256], index: 2, kind: input, shape index: {}, may-alias: {1,2}]
  %s3 = inlined_call_operand.vmem [shape: f32[128,1], index: 3, kind: input, shape index: {}]
  %s4 = inlined_call_operand.vmem [shape: f32[1,128], index: 4, kind: input, shape index: {}]
  %s5 = inlined_call_operand.vmem [shape: bf16[128,128], index: 5, kind: output, shape index: {}]
  %s6 = sld [smem:[#allocation0]]
  $region120: #{sagenet_forward.5} parent=0
    _
  %s8 = ssub.s32 1, %s6
  %s9 = scalar_select 0, %s8, %s6
  $region1: #{sagenet_forward.5} parent=0
    #allocation3 [shape = 'u8[32768]{0}', space=vmem, size = 0x8000, scoped, tag = 'input window, operand 1, single buffered']
    #allocation4 [shape = 'u8[32768]{0}', space=vmem, size = 0x8000, scoped, tag = 'input window, operand 2, single buffered']
    // Predicated region
    $region2: #{sagenet_forward.5} parent=1 // pred_check
      _
    $region3: #{sagenet_forward.5} parent=1 // pred_check_branch
      %11 = sbr.rel (0) target = $region5
    $region4: #{sagenet_forward.5} parent=1 // pred_region
      _
    $region5: #{sagenet_forward.5} parent=1 // pred_fallthru
      _
    // Predicated region
    $region6: #{sagenet_forward.5} parent=1 // pred_check
      _
    $region7: #{sagenet_forward.5} parent=1 // pred_check_branch
      %13 = sbr.rel (0) target = $region9
    $region8: #{sagenet_forward.5} parent=1 // pred_region
      %s14 = scalar_lea.vmem %s1, 4
      // Predicated region
      $region10: #{sagenet_forward.5} parent=8 // pred_check
        _
      $region11: #{sagenet_forward.5} parent=8 // pred_check_branch
        %16 = sbr.rel (0) target = $region13
      $region12: #{sagenet_forward.5} parent=8 // pred_region
        // Predicated region
        $region14: #{sagenet_forward.5} parent=12 // pred_check
          _
        $region15: #{sagenet_forward.5} parent=12 // pred_check_branch
          %18 = sbr.rel target = $region17
        $region16: #{sagenet_forward.5} parent=12 // pred_region
          // Predicated region
          $region29: #{sagenet_forward.5} parent=16 // pred_check
            _
          $region30: #{sagenet_forward.5} parent=16 // pred_check_branch
            %64 = sbr.rel (0) target = $region32
          $region31: #{sagenet_forward.5} parent=16 // pred_region
            loop: start=0, step=1, limit=1
            $region33: #{sagenet_forward.5} parent=31 // loop_pre_header
              _
            $region34: #{sagenet_forward.5} parent=31 // loop_header
              %s66 = sphi 0, %s70
              %p67 = scmp.ge.s32.totalorder %s66, 1
              %s71 = sphi %s14, %s14
              %s72 = sphi [#allocation3], [#allocation3]
            $region35: #{sagenet_forward.5} parent=31 // loop_header_branch
              %69 = sbr.rel (%p67) target = $region39
            $region36: #{sagenet_forward.5} parent=31 // loop_body
              _
            $region37: #{sagenet_forward.5} parent=31 // loop_footer
              %s70 = sadd.s32 1, %s66
            $region38: #{sagenet_forward.5} parent=31 // loop_footer_branch
              %65 = sbr.rel target = $region34
            $region39: #{sagenet_forward.5} parent=31 // loop_exit
              _
            %s74 = ssub.s32 16, 1
            loop: start=0, step=1, limit=1
            $region40: #{sagenet_forward.5} parent=31 // loop_pre_header
              _
            $region41: #{sagenet_forward.5} parent=31 // loop_header
              %s76 = sphi 0, %s80
              %p77 = scmp.ge.s32.totalorder %s76, 1
              %s81 = sphi %s14, %s14
              %s82 = sphi [#allocation3], [#allocation3]
            $region42: #{sagenet_forward.5} parent=31 // loop_header_branch
              %79 = sbr.rel (%p77) target = $region46
            $region43: #{sagenet_forward.5} parent=31 // loop_body
              %v83 = vld [vmem:[%s81] sm:%s74]
              %84 = vst [vmem:[%s82] sm:%s74] %v83
              %v85 = vld [vmem:[%s81 + $0x8] sm:%s74]
              %86 = vst [vmem:[%s82 + $0x4] sm:%s74] %v85
              %v87 = vld [vmem:[%s81 + $0x10] sm:%s74]
              %88 = vst [vmem:[%s82 + $0x8] sm:%s74] %v87
              %v89 = vld [vmem:[%s81 + $0x18] sm:%s74]
              %90 = vst [vmem:[%s82 + $0xc] sm:%s74] %v89
              %v91 = vld [vmem:[%s81 + $0x20] sm:%s74]
              %92 = vst [vmem:[%s82 + $0x10] sm:%s74] %v91
              %v93 = vld [vmem:[%s81 + $0x28] sm:%s74]
              %94 = vst [vmem:[%s82 + $0x14] sm:%s74] %v93
              %v95 = vld [vmem:[%s81 + $0x30] sm:%s74]
              %96 = vst [vmem:[%s82 + $0x18] sm:%s74] %v95
              %v97 = vld [vmem:[%s81 + $0x38] sm:%s74]
              %98 = vst [vmem:[%s82 + $0x1c] sm:%s74] %v97
              %v99 = vld [vmem:[%s81 + $0x40] sm:%s74]
              %100 = vst [vmem:[%s82 + $0x20] sm:%s74] %v99
              %v101 = vld [vmem:[%s81 + $0x48] sm:%s74]
              %102 = vst [vmem:[%s82 + $0x24] sm:%s74] %v101
              %v103 = vld [vmem:[%s81 + $0x50] sm:%s74]
              %104 = vst [vmem:[%s82 + $0x28] sm:%s74] %v103
              %v105 = vld [vmem:[%s81 + $0x58] sm:%s74]
              %106 = vst [vmem:[%s82 + $0x2c] sm:%s74] %v105
              %v107 = vld [vmem:[%s81 + $0x60] sm:%s74]
              %108 = vst [vmem:[%s82 + $0x30] sm:%s74] %v107
              %v109 = vld [vmem:[%s81 + $0x68] sm:%s74]
              %110 = vst [vmem:[%s82 + $0x34] sm:%s74] %v109
              %v111 = vld [vmem:[%s81 + $0x70] sm:%s74]
              %112 = vst [vmem:[%s82 + $0x38] sm:%s74] %v111
              %v113 = vld [vmem:[%s81 + $0x78] sm:%s74]
              %114 = vst [vmem:[%s82 + $0x3c] sm:%s74] %v113
            $region44: #{sagenet_forward.5} parent=31 // loop_footer
              %s80 = sadd.s32 1, %s76
            $region45: #{sagenet_forward.5} parent=31 // loop_footer_branch
              %75 = sbr.rel target = $region41
            $region46: #{sagenet_forward.5} parent=31 // loop_exit
              _
          $region32: #{sagenet_forward.5} parent=16 // pred_fallthru
            _
        $region17: #{sagenet_forward.5} parent=12 // pred_fallthru
          _
        // Predicated region
        $region18: #{sagenet_forward.5} parent=12 // pred_check
          _
        $region19: #{sagenet_forward.5} parent=12 // pred_check_branch
          %20 = sbr.rel (0) target = $region21
        $region20: #{sagenet_forward.5} parent=12 // pred_region
          %s22 = ssub.s32 16, 1
          loop: start=0, step=1, limit=1
          $region22: #{sagenet_forward.5} parent=20 // loop_pre_header
            _
          $region23: #{sagenet_forward.5} parent=20 // loop_header
            %s24 = sphi 0, %s28
            %p25 = scmp.ge.s32.totalorder %s24, 1
            %s29 = sphi %s14, %s14
            %s30 = sphi [#allocation3], [#allocation3]
          $region24: #{sagenet_forward.5} parent=20 // loop_header_branch
            %27 = sbr.rel (%p25) target = $region28
          $region25: #{sagenet_forward.5} parent=20 // loop_body
            %v31 = vld [vmem:[%s29] sm:%s22]
            %32 = vst [vmem:[%s30] sm:%s22] %v31
            %v33 = vld [vmem:[%s29 + $0x8] sm:%s22]
            %34 = vst [vmem:[%s30 + $0x4] sm:%s22] %v33
            %v35 = vld [vmem:[%s29 + $0x10] sm:%s22]
            %36 = vst [vmem:[%s30 + $0x8] sm:%s22] %v35
            %v37 = vld [vmem:[%s29 + $0x18] sm:%s22]
            %38 = vst [vmem:[%s30 + $0xc] sm:%s22] %v37
            %v39 = vld [vmem:[%s29 + $0x20] sm:%s22]
            %40 = vst [vmem:[%s30 + $0x10] sm:%s22] %v39
            %v41 = vld [vmem:[%s29 + $0x28] sm:%s22]
            %42 = vst [vmem:[%s30 + $0x14] sm:%s22] %v41
            %v43 = vld [vmem:[%s29 + $0x30] sm:%s22]
            %44 = vst [vmem:[%s30 + $0x18] sm:%s22] %v43
            %v45 = vld [vmem:[%s29 + $0x38] sm:%s22]
            %46 = vst [vmem:[%s30 + $0x1c] sm:%s22] %v45
            %v47 = vld [vmem:[%s29 + $0x40] sm:%s22]
            %48 = vst [vmem:[%s30 + $0x20] sm:%s22] %v47
            %v49 = vld [vmem:[%s29 + $0x48] sm:%s22]
            %50 = vst [vmem:[%s30 + $0x24] sm:%s22] %v49
            %v51 = vld [vmem:[%s29 + $0x50] sm:%s22]
            %52 = vst [vmem:[%s30 + $0x28] sm:%s22] %v51
            %v53 = vld [vmem:[%s29 + $0x58] sm:%s22]
            %54 = vst [vmem:[%s30 + $0x2c] sm:%s22] %v53
            %v55 = vld [vmem:[%s29 + $0x60] sm:%s22]
            %56 = vst [vmem:[%s30 + $0x30] sm:%s22] %v55
            %v57 = vld [vmem:[%s29 + $0x68] sm:%s22]
            %58 = vst [vmem:[%s30 + $0x34] sm:%s22] %v57
            %v59 = vld [vmem:[%s29 + $0x70] sm:%s22]
            %60 = vst [vmem:[%s30 + $0x38] sm:%s22] %v59
            %v61 = vld [vmem:[%s29 + $0x78] sm:%s22]
            %62 = vst [vmem:[%s30 + $0x3c] sm:%s22] %v61
          $region26: #{sagenet_forward.5} parent=20 // loop_footer
            %s28 = sadd.s32 1, %s24
          $region27: #{sagenet_forward.5} parent=20 // loop_footer_branch
            %23 = sbr.rel target = $region23
          $region28: #{sagenet_forward.5} parent=20 // loop_exit
            _
        $region21: #{sagenet_forward.5} parent=12 // pred_fallthru
          _
      $region13: #{sagenet_forward.5} parent=8 // pred_fallthru
        _
      %115 = vnop
    $region9: #{sagenet_forward.5} parent=1 // pred_fallthru
      _
    // Predicated region
    $region47: #{sagenet_forward.5} parent=1 // pred_check
      _
    $region48: #{sagenet_forward.5} parent=1 // pred_check_branch
      %117 = sbr.rel (0) target = $region50
    $region49: #{sagenet_forward.5} parent=1 // pred_region
      // Predicated region
      $region51: #{sagenet_forward.5} parent=49 // pred_check
        _
      $region52: #{sagenet_forward.5} parent=49 // pred_check_branch
        %119 = sbr.rel (0) target = $region54
      $region53: #{sagenet_forward.5} parent=49 // pred_region
        // Predicated region
        $region55: #{sagenet_forward.5} parent=53 // pred_check
          _
        $region56: #{sagenet_forward.5} parent=53 // pred_check_branch
          %121 = sbr.rel target = $region58
        $region57: #{sagenet_forward.5} parent=53 // pred_region
          // Predicated region
          $region70: #{sagenet_forward.5} parent=57 // pred_check
            _
          $region71: #{sagenet_forward.5} parent=57 // pred_check_branch
            %167 = sbr.rel (0) target = $region73
          $region72: #{sagenet_forward.5} parent=57 // pred_region
            loop: start=0, step=1, limit=1
            $region74: #{sagenet_forward.5} parent=72 // loop_pre_header
              _
            $region75: #{sagenet_forward.5} parent=72 // loop_header
              %s169 = sphi 0, %s173
              %p170 = scmp.ge.s32.totalorder %s169, 1
              %s174 = sphi %s2, %s2
              %s175 = sphi [#allocation4], [#allocation4]
            $region76: #{sagenet_forward.5} parent=72 // loop_header_branch
              %172 = sbr.rel (%p170) target = $region80
            $region77: #{sagenet_forward.5} parent=72 // loop_body
              _
            $region78: #{sagenet_forward.5} parent=72 // loop_footer
              %s173 = sadd.s32 1, %s169
            $region79: #{sagenet_forward.5} parent=72 // loop_footer_branch
              %168 = sbr.rel target = $region75
            $region80: #{sagenet_forward.5} parent=72 // loop_exit
              _
            %s177 = ssub.s32 16, 1
            loop: start=0, step=1, limit=1
            $region81: #{sagenet_forward.5} parent=72 // loop_pre_header
              _
            $region82: #{sagenet_forward.5} parent=72 // loop_header
              %s179 = sphi 0, %s183
              %p180 = scmp.ge.s32.totalorder %s179, 1
              %s184 = sphi %s2, %s2
              %s185 = sphi [#allocation4], [#allocation4]
            $region83: #{sagenet_forward.5} parent=72 // loop_header_branch
              %182 = sbr.rel (%p180) target = $region87
            $region84: #{sagenet_forward.5} parent=72 // loop_body
              %v186 = vld [vmem:[%s184] sm:%s177]
              %187 = vst [vmem:[%s185] sm:%s177] %v186
              %v188 = vld [vmem:[%s184 + $0x8] sm:%s177]
              %189 = vst [vmem:[%s185 + $0x4] sm:%s177] %v188
              %v190 = vld [vmem:[%s184 + $0x10] sm:%s177]
              %191 = vst [vmem:[%s185 + $0x8] sm:%s177] %v190
              %v192 = vld [vmem:[%s184 + $0x18] sm:%s177]
              %193 = vst [vmem:[%s185 + $0xc] sm:%s177] %v192
              %v194 = vld [vmem:[%s184 + $0x20] sm:%s177]
              %195 = vst [vmem:[%s185 + $0x10] sm:%s177] %v194
              %v196 = vld [vmem:[%s184 + $0x28] sm:%s177]
              %197 = vst [vmem:[%s185 + $0x14] sm:%s177] %v196
              %v198 = vld [vmem:[%s184 + $0x30] sm:%s177]
              %199 = vst [vmem:[%s185 + $0x18] sm:%s177] %v198
              %v200 = vld [vmem:[%s184 + $0x38] sm:%s177]
              %201 = vst [vmem:[%s185 + $0x1c] sm:%s177] %v200
              %v202 = vld [vmem:[%s184 + $0x40] sm:%s177]
              %203 = vst [vmem:[%s185 + $0x20] sm:%s177] %v202
              %v204 = vld [vmem:[%s184 + $0x48] sm:%s177]
              %205 = vst [vmem:[%s185 + $0x24] sm:%s177] %v204
              %v206 = vld [vmem:[%s184 + $0x50] sm:%s177]
              %207 = vst [vmem:[%s185 + $0x28] sm:%s177] %v206
              %v208 = vld [vmem:[%s184 + $0x58] sm:%s177]
              %209 = vst [vmem:[%s185 + $0x2c] sm:%s177] %v208
              %v210 = vld [vmem:[%s184 + $0x60] sm:%s177]
              %211 = vst [vmem:[%s185 + $0x30] sm:%s177] %v210
              %v212 = vld [vmem:[%s184 + $0x68] sm:%s177]
              %213 = vst [vmem:[%s185 + $0x34] sm:%s177] %v212
              %v214 = vld [vmem:[%s184 + $0x70] sm:%s177]
              %215 = vst [vmem:[%s185 + $0x38] sm:%s177] %v214
              %v216 = vld [vmem:[%s184 + $0x78] sm:%s177]
              %217 = vst [vmem:[%s185 + $0x3c] sm:%s177] %v216
            $region85: #{sagenet_forward.5} parent=72 // loop_footer
              %s183 = sadd.s32 1, %s179
            $region86: #{sagenet_forward.5} parent=72 // loop_footer_branch
              %178 = sbr.rel target = $region82
            $region87: #{sagenet_forward.5} parent=72 // loop_exit
              _
          $region73: #{sagenet_forward.5} parent=57 // pred_fallthru
            _
        $region58: #{sagenet_forward.5} parent=53 // pred_fallthru
          _
        // Predicated region
        $region59: #{sagenet_forward.5} parent=53 // pred_check
          _
        $region60: #{sagenet_forward.5} parent=53 // pred_check_branch
          %123 = sbr.rel (0) target = $region62
        $region61: #{sagenet_forward.5} parent=53 // pred_region
          %s125 = ssub.s32 16, 1
          loop: start=0, step=1, limit=1
          $region63: #{sagenet_forward.5} parent=61 // loop_pre_header
            _
          $region64: #{sagenet_forward.5} parent=61 // loop_header
            %s127 = sphi 0, %s131
            %p128 = scmp.ge.s32.totalorder %s127, 1
            %s132 = sphi %s2, %s2
            %s133 = sphi [#allocation4], [#allocation4]
          $region65: #{sagenet_forward.5} parent=61 // loop_header_branch
            %130 = sbr.rel (%p128) target = $region69
          $region66: #{sagenet_forward.5} parent=61 // loop_body
            %v134 = vld [vmem:[%s132] sm:%s125]
            %135 = vst [vmem:[%s133] sm:%s125] %v134
            %v136 = vld [vmem:[%s132 + $0x8] sm:%s125]
            %137 = vst [vmem:[%s133 + $0x4] sm:%s125] %v136
            %v138 = vld [vmem:[%s132 + $0x10] sm:%s125]
            %139 = vst [vmem:[%s133 + $0x8] sm:%s125] %v138
            %v140 = vld [vmem:[%s132 + $0x18] sm:%s125]
            %141 = vst [vmem:[%s133 + $0xc] sm:%s125] %v140
            %v142 = vld [vmem:[%s132 + $0x20] sm:%s125]
            %143 = vst [vmem:[%s133 + $0x10] sm:%s125] %v142
            %v144 = vld [vmem:[%s132 + $0x28] sm:%s125]
            %145 = vst [vmem:[%s133 + $0x14] sm:%s125] %v144
            %v146 = vld [vmem:[%s132 + $0x30] sm:%s125]
            %147 = vst [vmem:[%s133 + $0x18] sm:%s125] %v146
            %v148 = vld [vmem:[%s132 + $0x38] sm:%s125]
            %149 = vst [vmem:[%s133 + $0x1c] sm:%s125] %v148
            %v150 = vld [vmem:[%s132 + $0x40] sm:%s125]
            %151 = vst [vmem:[%s133 + $0x20] sm:%s125] %v150
            %v152 = vld [vmem:[%s132 + $0x48] sm:%s125]
            %153 = vst [vmem:[%s133 + $0x24] sm:%s125] %v152
            %v154 = vld [vmem:[%s132 + $0x50] sm:%s125]
            %155 = vst [vmem:[%s133 + $0x28] sm:%s125] %v154
            %v156 = vld [vmem:[%s132 + $0x58] sm:%s125]
            %157 = vst [vmem:[%s133 + $0x2c] sm:%s125] %v156
            %v158 = vld [vmem:[%s132 + $0x60] sm:%s125]
            %159 = vst [vmem:[%s133 + $0x30] sm:%s125] %v158
            %v160 = vld [vmem:[%s132 + $0x68] sm:%s125]
            %161 = vst [vmem:[%s133 + $0x34] sm:%s125] %v160
            %v162 = vld [vmem:[%s132 + $0x70] sm:%s125]
            %163 = vst [vmem:[%s133 + $0x38] sm:%s125] %v162
            %v164 = vld [vmem:[%s132 + $0x78] sm:%s125]
            %165 = vst [vmem:[%s133 + $0x3c] sm:%s125] %v164
          $region67: #{sagenet_forward.5} parent=61 // loop_footer
            %s131 = sadd.s32 1, %s127
          $region68: #{sagenet_forward.5} parent=61 // loop_footer_branch
            %126 = sbr.rel target = $region64
          $region69: #{sagenet_forward.5} parent=61 // loop_exit
            _
        $region62: #{sagenet_forward.5} parent=53 // pred_fallthru
          _
      $region54: #{sagenet_forward.5} parent=49 // pred_fallthru
        _
      %218 = vnop
    $region50: #{sagenet_forward.5} parent=1 // pred_fallthru
      _
    // Predicated region
    $region88: #{sagenet_forward.5} parent=1 // pred_check
      _
    $region89: #{sagenet_forward.5} parent=1 // pred_check_branch
      %220 = sbr.rel (0) target = $region91
    $region90: #{sagenet_forward.5} parent=1 // pred_region
      _
    $region91: #{sagenet_forward.5} parent=1 // pred_fallthru
      _
    // Predicated region
    $region92: #{sagenet_forward.5} parent=1 // pred_check
      _
    $region93: #{sagenet_forward.5} parent=1 // pred_check_branch
      %222 = sbr.rel (0) target = $region95
    $region94: #{sagenet_forward.5} parent=1 // pred_region
      _
    $region95: #{sagenet_forward.5} parent=1 // pred_fallthru
      _
    // Predicated region
    $region96: #{sagenet_forward.5} parent=1 // pred_check
      _
    $region97: #{sagenet_forward.5} parent=1 // pred_check_branch
      %224 = sbr.rel (0) target = $region99
    $region98: #{sagenet_forward.5} parent=1 // pred_region
      _
    $region99: #{sagenet_forward.5} parent=1 // pred_fallthru
      _
    // Predicated region
    $region100: #{sagenet_forward.5} parent=1 // pred_check
      _
    $region101: #{sagenet_forward.5} parent=1 // pred_check_branch
      %226 = sbr.rel (0) target = $region103
    $region102: #{sagenet_forward.5} parent=1 // pred_region
      _
    $region103: #{sagenet_forward.5} parent=1 // pred_fallthru
      _
    %p227 = scmp.eq.s32.totalorder 0, 0
    // Predicated region
    $region104: #{sagenet_forward.5} parent=1 // pred_check
      %p228 = pneg %p227
    $region105: #{sagenet_forward.5} parent=1 // pred_check_branch
      %230 = sbr.rel (%p228) target = $region107
    $region106: #{sagenet_forward.5} parent=1 // pred_region
      %231 = vst [vmem:[#allocation2] sm:$0xff] 0.0
      %232 = vst [vmem:[#allocation2 + $0x8] sm:$0xff] 0.0
      %233 = vst [vmem:[#allocation2 + $0x10] sm:$0xff] 0.0
      %234 = vst [vmem:[#allocation2 + $0x18] sm:$0xff] 0.0
      %235 = vst [vmem:[#allocation2 + $0x20] sm:$0xff] 0.0
      %236 = vst [vmem:[#allocation2 + $0x28] sm:$0xff] 0.0
      %237 = vst [vmem:[#allocation2 + $0x30] sm:$0xff] 0.0
      %238 = vst [vmem:[#allocation2 + $0x38] sm:$0xff] 0.0
      %239 = vst [vmem:[#allocation2 + $0x40] sm:$0xff] 0.0
      %240 = vst [vmem:[#allocation2 + $0x48] sm:$0xff] 0.0
      %241 = vst [vmem:[#allocation2 + $0x50] sm:$0xff] 0.0
      %242 = vst [vmem:[#allocation2 + $0x58] sm:$0xff] 0.0
      %243 = vst [vmem:[#allocation2 + $0x60] sm:$0xff] 0.0
      %244 = vst [vmem:[#allocation2 + $0x68] sm:$0xff] 0.0
      %245 = vst [vmem:[#allocation2 + $0x70] sm:$0xff] 0.0
      %246 = vst [vmem:[#allocation2 + $0x78] sm:$0xff] 0.0
    $region107: #{sagenet_forward.5} parent=1 // pred_fallthru
      _
    %v247 = vld [vmem:[#allocation2] sm:$0xff]
    %v248 = vld [vmem:[#allocation2 + $0x8] sm:$0xff]
    %v249 = vld [vmem:[#allocation2 + $0x10] sm:$0xff]
    %v250 = vld [vmem:[#allocation2 + $0x18] sm:$0xff]
    %v251 = vld [vmem:[#allocation2 + $0x20] sm:$0xff]
    %v252 = vld [vmem:[#allocation2 + $0x28] sm:$0xff]
    %v253 = vld [vmem:[#allocation2 + $0x30] sm:$0xff]
    %v254 = vld [vmem:[#allocation2 + $0x38] sm:$0xff]
    %v255 = vld [vmem:[#allocation2 + $0x40] sm:$0xff]
    %v256 = vld [vmem:[#allocation2 + $0x48] sm:$0xff]
    %v257 = vld [vmem:[#allocation2 + $0x50] sm:$0xff]
    %v258 = vld [vmem:[#allocation2 + $0x58] sm:$0xff]
    %v259 = vld [vmem:[#allocation2 + $0x60] sm:$0xff]
    %v260 = vld [vmem:[#allocation2 + $0x68] sm:$0xff]
    %v261 = vld [vmem:[#allocation2 + $0x70] sm:$0xff]
    %v262 = vld [vmem:[#allocation2 + $0x78] sm:$0xff]
    %v263 = vld [vmem:[%s0] sm:$0xf]
    %v264 = vld [vmem:[%s0 + $0x4] sm:$0xf]
    %v265 = vld [vmem:[%s0 + $0x8] sm:$0xf]
    %v266 = vld [vmem:[%s0 + $0xc] sm:$0xf]
    %v267 = vld [vmem:[%s0 + $0x10] sm:$0xf]
    %v268 = vld [vmem:[%s0 + $0x14] sm:$0xf]
    %v269 = vld [vmem:[%s0 + $0x18] sm:$0xf]
    %v270 = vld [vmem:[%s0 + $0x1c] sm:$0xf]
    %v271 = vld [vmem:[%s0 + $0x20] sm:$0xf]
    %v272 = vld [vmem:[%s0 + $0x24] sm:$0xf]
    %v273 = vld [vmem:[%s0 + $0x28] sm:$0xf]
    %v274 = vld [vmem:[%s0 + $0x2c] sm:$0xf]
    %v275 = vld [vmem:[%s0 + $0x30] sm:$0xf]
    %v276 = vld [vmem:[%s0 + $0x34] sm:$0xf]
    %v277 = vld [vmem:[%s0 + $0x38] sm:$0xf]
    %v278 = vld [vmem:[%s0 + $0x3c] sm:$0xf]
    %v279 = vld [vmem:[#allocation3] sm:$0xf]
    %v280 = vld [vmem:[#allocation3 + $0x4] sm:$0xf]
    %v281 = vld [vmem:[#allocation3 + $0x8] sm:$0xf]
    %v282 = vld [vmem:[#allocation3 + $0xc] sm:$0xf]
    %v283 = vld [vmem:[#allocation3 + $0x10] sm:$0xf]
    %v284 = vld [vmem:[#allocation3 + $0x14] sm:$0xf]
    %v285 = vld [vmem:[#allocation3 + $0x18] sm:$0xf]
    %v286 = vld [vmem:[#allocation3 + $0x1c] sm:$0xf]
    %v287 = vld [vmem:[#allocation3 + $0x20] sm:$0xf]
    %v288 = vld [vmem:[#allocation3 + $0x24] sm:$0xf]
    %v289 = vld [vmem:[#allocation3 + $0x28] sm:$0xf]
    %v290 = vld [vmem:[#allocation3 + $0x2c] sm:$0xf]
    %v291 = vld [vmem:[#allocation3 + $0x30] sm:$0xf]
    %v292 = vld [vmem:[#allocation3 + $0x34] sm:$0xf]
    %v293 = vld [vmem:[#allocation3 + $0x38] sm:$0xf]
    %v294 = vld [vmem:[#allocation3 + $0x3c] sm:$0xf]
    %v311 = vunpack.c.l.b16 %v263
    %v312 = vunpack.c.l.b16 %v264
    %v313 = vunpack.c.l.b16 %v265
    %v314 = vunpack.c.l.b16 %v266
    %v315 = vunpack.c.l.b16 %v267
    %v316 = vunpack.c.l.b16 %v268
    %v317 = vunpack.c.l.b16 %v269
    %v318 = vunpack.c.l.b16 %v270
    %v319 = vunpack.c.l.b16 %v271
    %v320 = vunpack.c.l.b16 %v272
    %v321 = vunpack.c.l.b16 %v273
    %v322 = vunpack.c.l.b16 %v274
    %v323 = vunpack.c.l.b16 %v275
    %v324 = vunpack.c.l.b16 %v276
    %v325 = vunpack.c.l.b16 %v277
    %v326 = vunpack.c.l.b16 %v278
    %v327 = vpack.c.b16 %v312, %v311
    %v328 = vpack.c.b16 %v314, %v313
    %v329 = vpack.c.b16 %v316, %v315
    %v330 = vpack.c.b16 %v318, %v317
    %v331 = vpack.c.b16 %v320, %v319
    %v332 = vpack.c.b16 %v322, %v321
    %v333 = vpack.c.b16 %v324, %v323
    %v334 = vpack.c.b16 %v326, %v325
    %v359 = vunpack.c.l.b16 %v279
    %v360 = vunpack.c.l.b16 %v280
    %v361 = vunpack.c.l.b16 %v281
    %v362 = vunpack.c.l.b16 %v282
    %v363 = vunpack.c.l.b16 %v283
    %v364 = vunpack.c.l.b16 %v284
    %v365 = vunpack.c.l.b16 %v285
    %v366 = vunpack.c.l.b16 %v286
    %v367 = vunpack.c.l.b16 %v287
    %v368 = vunpack.c.l.b16 %v288
    %v369 = vunpack.c.l.b16 %v289
    %v370 = vunpack.c.l.b16 %v290
    %v371 = vunpack.c.l.b16 %v291
    %v372 = vunpack.c.l.b16 %v292
    %v373 = vunpack.c.l.b16 %v293
    %v374 = vunpack.c.l.b16 %v294
    %v375 = vpack.c.b16 %v360, %v359
    %v376 = vpack.c.b16 %v362, %v361
    %v377 = vpack.c.b16 %v364, %v363
    %v378 = vpack.c.b16 %v366, %v365
    %v379 = vpack.c.b16 %v368, %v367
    %v380 = vpack.c.b16 %v370, %v369
    %v381 = vpack.c.b16 %v372, %v371
    %v382 = vpack.c.b16 %v374, %v373
    %391 = vmatpush.bf16.msra.mxu0 %v382
    %392 = vmatpush.bf16.msra.mxu0 %v381
    %393 = vmatpush.bf16.msra.mxu0 %v380
    %394 = vmatpush.bf16.msra.mxu0 %v379
    %395 = vmatpush.bf16.msra.mxu0 %v378
    %396 = vmatpush.bf16.msra.mxu0 %v377
    %397 = vmatpush.bf16.msra.mxu0 %v376
    %398 = vmatpush.bf16.msra.mxu0 %v375
    %399 = vmatmul.bf16.gmra.mxu0 %v327
    %v400 = vpop.f32.mrf.mxu0
    %v401 = vadd.f32 0.0, %v400
    %v402 = vpop.f32.mrf.mxu0
    %v403 = vadd.f32 0.0, %v402
    %404 = vmatmul.bf16.gmra.mxu0 %v328
    %v405 = vpop.f32.mrf.mxu0
    %v406 = vadd.f32 0.0, %v405
    %v407 = vpop.f32.mrf.mxu0
    %v408 = vadd.f32 0.0, %v407
    %409 = vmatmul.bf16.gmra.mxu0 %v329
    %v410 = vpop.f32.mrf.mxu0
    %v411 = vadd.f32 0.0, %v410
    %v412 = vpop.f32.mrf.mxu0
    %v413 = vadd.f32 0.0, %v412
    %414 = vmatmul.bf16.gmra.mxu0 %v330
    %v415 = vpop.f32.mrf.mxu0
    %v416 = vadd.f32 0.0, %v415
    %v417 = vpop.f32.mrf.mxu0
    %v418 = vadd.f32 0.0, %v417
    %419 = vmatmul.bf16.gmra.mxu0 %v331
    %v420 = vpop.f32.mrf.mxu0
    %v421 = vadd.f32 0.0, %v420
    %v422 = vpop.f32.mrf.mxu0
    %v423 = vadd.f32 0.0, %v422
    %424 = vmatmul.bf16.gmra.mxu0 %v332
    %v425 = vpop.f32.mrf.mxu0
    %v426 = vadd.f32 0.0, %v425
    %v427 = vpop.f32.mrf.mxu0
    %v428 = vadd.f32 0.0, %v427
    %429 = vmatmul.bf16.gmra.mxu0 %v333
    %v430 = vpop.f32.mrf.mxu0
    %v431 = vadd.f32 0.0, %v430
    %v432 = vpop.f32.mrf.mxu0
    %v433 = vadd.f32 0.0, %v432
    %434 = vmatmul.bf16.gmra.mxu0 %v334
    %v435 = vpop.f32.mrf.mxu0
    %v436 = vadd.f32 0.0, %v435
    %v437 = vpop.f32.mrf.mxu0
    %v438 = vadd.f32 0.0, %v437
    %439 = vdwg.mxu0
    %v440 = vadd.f32 %v247, %v401
    %v441 = vadd.f32 %v248, %v403
    %v442 = vadd.f32 %v249, %v406
    %v443 = vadd.f32 %v250, %v408
    %v444 = vadd.f32 %v251, %v411
    %v445 = vadd.f32 %v252, %v413
    %v446 = vadd.f32 %v253, %v416
    %v447 = vadd.f32 %v254, %v418
    %v448 = vadd.f32 %v255, %v421
    %v449 = vadd.f32 %v256, %v423
    %v450 = vadd.f32 %v257, %v426
    %v451 = vadd.f32 %v258, %v428
    %v452 = vadd.f32 %v259, %v431
    %v453 = vadd.f32 %v260, %v433
    %v454 = vadd.f32 %v261, %v436
    %v455 = vadd.f32 %v262, %v438
    %456 = vst [vmem:[#allocation2] sm:$0xff] %v440
    %457 = vst [vmem:[#allocation2 + $0x8] sm:$0xff] %v441
    %458 = vst [vmem:[#allocation2 + $0x10] sm:$0xff] %v442
    %459 = vst [vmem:[#allocation2 + $0x18] sm:$0xff] %v443
    %460 = vst [vmem:[#allocation2 + $0x20] sm:$0xff] %v444
    %461 = vst [vmem:[#allocation2 + $0x28] sm:$0xff] %v445
    %462 = vst [vmem:[#allocation2 + $0x30] sm:$0xff] %v446
    %463 = vst [vmem:[#allocation2 + $0x38] sm:$0xff] %v447
    %464 = vst [vmem:[#allocation2 + $0x40] sm:$0xff] %v448
    %465 = vst [vmem:[#allocation2 + $0x48] sm:$0xff] %v449
    %466 = vst [vmem:[#allocation2 + $0x50] sm:$0xff] %v450
    %467 = vst [vmem:[#allocation2 + $0x58] sm:$0xff] %v451
    %468 = vst [vmem:[#allocation2 + $0x60] sm:$0xff] %v452
    %469 = vst [vmem:[#allocation2 + $0x68] sm:$0xff] %v453
    %470 = vst [vmem:[#allocation2 + $0x70] sm:$0xff] %v454
    %471 = vst [vmem:[#allocation2 + $0x78] sm:$0xff] %v455
    // Predicated region
    $region108: #{sagenet_forward.5} parent=1 // pred_check
      %p472 = pneg %p227
    $region109: #{sagenet_forward.5} parent=1 // pred_check_branch
      %474 = sbr.rel (%p472) target = $region111
    $region110: #{sagenet_forward.5} parent=1 // pred_region
      %v475 = vld [vmem:[#allocation4] sm:$0xf]
      %v476 = vld [vmem:[#allocation4 + $0x4] sm:$0xf]
      %v477 = vld [vmem:[#allocation4 + $0x8] sm:$0xf]
      %v478 = vld [vmem:[#allocation4 + $0xc] sm:$0xf]
      %v479 = vld [vmem:[#allocation4 + $0x10] sm:$0xf]
      %v480 = vld [vmem:[#allocation4 + $0x14] sm:$0xf]
      %v481 = vld [vmem:[#allocation4 + $0x18] sm:$0xf]
      %v482 = vld [vmem:[#allocation4 + $0x1c] sm:$0xf]
      %v483 = vld [vmem:[#allocation4 + $0x20] sm:$0xf]
      %v484 = vld [vmem:[#allocation4 + $0x24] sm:$0xf]
      %v485 = vld [vmem:[#allocation4 + $0x28] sm:$0xf]
      %v486 = vld [vmem:[#allocation4 + $0x2c] sm:$0xf]
      %v487 = vld [vmem:[#allocation4 + $0x30] sm:$0xf]
      %v488 = vld [vmem:[#allocation4 + $0x34] sm:$0xf]
      %v489 = vld [vmem:[#allocation4 + $0x38] sm:$0xf]
      %v490 = vld [vmem:[#allocation4 + $0x3c] sm:$0xf]
      %v491 = vunpack.c.l.bf16 %v475
      %v492 = vunpack.c.l.bf16 %v476
      %v493 = vunpack.c.l.bf16 %v477
      %v494 = vunpack.c.l.bf16 %v478
      %v495 = vunpack.c.l.bf16 %v479
      %v496 = vunpack.c.l.bf16 %v480
      %v497 = vunpack.c.l.bf16 %v481
      %v498 = vunpack.c.l.bf16 %v482
      %v499 = vunpack.c.l.bf16 %v483
      %v500 = vunpack.c.l.bf16 %v484
      %v501 = vunpack.c.l.bf16 %v485
      %v502 = vunpack.c.l.bf16 %v486
      %v503 = vunpack.c.l.bf16 %v487
      %v504 = vunpack.c.l.bf16 %v488
      %v505 = vunpack.c.l.bf16 %v489
      %v506 = vunpack.c.l.bf16 %v490
      %v507 = vld [vmem:[%s3] sm:$0xff]
      %v508 = vld [vmem:[%s3 + $0x8] sm:$0xff]
      %v509 = vld [vmem:[%s3 + $0x10] sm:$0xff]
      %v510 = vld [vmem:[%s3 + $0x18] sm:$0xff]
      %v511 = vld [vmem:[%s3 + $0x20] sm:$0xff]
      %v512 = vld [vmem:[%s3 + $0x28] sm:$0xff]
      %v513 = vld [vmem:[%s3 + $0x30] sm:$0xff]
      %v514 = vld [vmem:[%s3 + $0x38] sm:$0xff]
      %v515 = vld [vmem:[%s3 + $0x40] sm:$0xff]
      %v516 = vld [vmem:[%s3 + $0x48] sm:$0xff]
      %v517 = vld [vmem:[%s3 + $0x50] sm:$0xff]
      %v518 = vld [vmem:[%s3 + $0x58] sm:$0xff]
      %v519 = vld [vmem:[%s3 + $0x60] sm:$0xff]
      %v520 = vld [vmem:[%s3 + $0x68] sm:$0xff]
      %v521 = vld [vmem:[%s3 + $0x70] sm:$0xff]
      %v522 = vld [vmem:[%s3 + $0x78] sm:$0xff]
      %v523 = vld [vmem:[#allocation2] sm:$0xff]
      %v524 = vld [vmem:[#allocation2 + $0x8] sm:$0xff]
      %v525 = vld [vmem:[#allocation2 + $0x10] sm:$0xff]
      %v526 = vld [vmem:[#allocation2 + $0x18] sm:$0xff]
      %v527 = vld [vmem:[#allocation2 + $0x20] sm:$0xff]
      %v528 = vld [vmem:[#allocation2 + $0x28] sm:$0xff]
      %v529 = vld [vmem:[#allocation2 + $0x30] sm:$0xff]
      %v530 = vld [vmem:[#allocation2 + $0x38] sm:$0xff]
      %v531 = vld [vmem:[#allocation2 + $0x40] sm:$0xff]
      %v532 = vld [vmem:[#allocation2 + $0x48] sm:$0xff]
      %v533 = vld [vmem:[#allocation2 + $0x50] sm:$0xff]
      %v534 = vld [vmem:[#allocation2 + $0x58] sm:$0xff]
      %v535 = vld [vmem:[#allocation2 + $0x60] sm:$0xff]
      %v536 = vld [vmem:[#allocation2 + $0x68] sm:$0xff]
      %v537 = vld [vmem:[#allocation2 + $0x70] sm:$0xff]
      %v538 = vld [vmem:[#allocation2 + $0x78] sm:$0xff]
      %540 = vset.pattern.permute.xlu0 0
      %541 = vperm.xlu0 %540, %v507
      %v542 = vpop.permute.xlu0 %541
      %545 = vset.pattern.permute.xlu0 0
      %546 = vperm.xlu0 %545, %v508
      %v547 = vpop.permute.xlu0 %546
      %550 = vset.pattern.permute.xlu0 0
      %551 = vperm.xlu0 %550, %v509
      %v552 = vpop.permute.xlu0 %551
      %555 = vset.pattern.permute.xlu0 0
      %556 = vperm.xlu0 %555, %v510
      %v557 = vpop.permute.xlu0 %556
      %560 = vset.pattern.permute.xlu0 0
      %561 = vperm.xlu0 %560, %v511
      %v562 = vpop.permute.xlu0 %561
      %565 = vset.pattern.permute.xlu0 0
      %566 = vperm.xlu0 %565, %v512
      %v567 = vpop.permute.xlu0 %566
      %570 = vset.pattern.permute.xlu0 0
      %571 = vperm.xlu0 %570, %v513
      %v572 = vpop.permute.xlu0 %571
      %575 = vset.pattern.permute.xlu0 0
      %576 = vperm.xlu0 %575, %v514
      %v577 = vpop.permute.xlu0 %576
      %580 = vset.pattern.permute.xlu0 0
      %581 = vperm.xlu0 %580, %v515
      %v582 = vpop.permute.xlu0 %581
      %585 = vset.pattern.permute.xlu0 0
      %586 = vperm.xlu0 %585, %v516
      %v587 = vpop.permute.xlu0 %586
      %590 = vset.pattern.permute.xlu0 0
      %591 = vperm.xlu0 %590, %v517
      %v592 = vpop.permute.xlu0 %591
      %595 = vset.pattern.permute.xlu0 0
      %596 = vperm.xlu0 %595, %v518
      %v597 = vpop.permute.xlu0 %596
      %600 = vset.pattern.permute.xlu0 0
      %601 = vperm.xlu0 %600, %v519
      %v602 = vpop.permute.xlu0 %601
      %605 = vset.pattern.permute.xlu0 0
      %606 = vperm.xlu0 %605, %v520
      %v607 = vpop.permute.xlu0 %606
      %610 = vset.pattern.permute.xlu0 0
      %611 = vperm.xlu0 %610, %v521
      %v612 = vpop.permute.xlu0 %611
      %615 = vset.pattern.permute.xlu0 0
      %616 = vperm.xlu0 %615, %v522
      %v617 = vpop.permute.xlu0 %616
      %v619 = vmul.f32 %v542, %v523
      %v620 = vmul.f32 %v547, %v524
      %v621 = vmul.f32 %v552, %v525
      %v622 = vmul.f32 %v557, %v526
      %v623 = vmul.f32 %v562, %v527
      %v624 = vmul.f32 %v567, %v528
      %v625 = vmul.f32 %v572, %v529
      %v626 = vmul.f32 %v577, %v530
      %v627 = vmul.f32 %v582, %v531
      %v628 = vmul.f32 %v587, %v532
      %v629 = vmul.f32 %v592, %v533
      %v630 = vmul.f32 %v597, %v534
      %v631 = vmul.f32 %v602, %v535
      %v632 = vmul.f32 %v607, %v536
      %v633 = vmul.f32 %v612, %v537
      %v634 = vmul.f32 %v617, %v538
      %v635 = vadd.f32 %v491, %v619
      %v636 = vadd.f32 %v492, %v620
      %v637 = vadd.f32 %v493, %v621
      %v638 = vadd.f32 %v494, %v622
      %v639 = vadd.f32 %v495, %v623
      %v640 = vadd.f32 %v496, %v624
      %v641 = vadd.f32 %v497, %v625
      %v642 = vadd.f32 %v498, %v626
      %v643 = vadd.f32 %v499, %v627
      %v644 = vadd.f32 %v500, %v628
      %v645 = vadd.f32 %v501, %v629
      %v646 = vadd.f32 %v502, %v630
      %v647 = vadd.f32 %v503, %v631
      %v648 = vadd.f32 %v504, %v632
      %v649 = vadd.f32 %v505, %v633
      %v650 = vadd.f32 %v506, %v634
      %v651 = vld [vmem:[%s4] sm:$0x1]
      %v653 = vperm.slane %v651, 0
      %v655 = vadd.f32 %v635, %v653
      %v656 = vadd.f32 %v636, %v653
      %v657 = vadd.f32 %v637, %v653
      %v658 = vadd.f32 %v638, %v653
      %v659 = vadd.f32 %v639, %v653
      %v660 = vadd.f32 %v640, %v653
      %v661 = vadd.f32 %v641, %v653
      %v662 = vadd.f32 %v642, %v653
      %v663 = vadd.f32 %v643, %v653
      %v664 = vadd.f32 %v644, %v653
      %v665 = vadd.f32 %v645, %v653
      %v666 = vadd.f32 %v646, %v653
      %v667 = vadd.f32 %v647, %v653
      %v668 = vadd.f32 %v648, %v653
      %v669 = vadd.f32 %v649, %v653
      %v670 = vadd.f32 %v650, %v653
      %v671 = vmax.f32 %v655, 0.0
      %v672 = vmax.f32 %v656, 0.0
      %v673 = vmax.f32 %v657, 0.0
      %v674 = vmax.f32 %v658, 0.0
      %v675 = vmax.f32 %v659, 0.0
      %v676 = vmax.f32 %v660, 0.0
      %v677 = vmax.f32 %v661, 0.0
      %v678 = vmax.f32 %v662, 0.0
      %v679 = vmax.f32 %v663, 0.0
      %v680 = vmax.f32 %v664, 0.0
      %v681 = vmax.f32 %v665, 0.0
      %v682 = vmax.f32 %v666, 0.0
      %v683 = vmax.f32 %v667, 0.0
      %v684 = vmax.f32 %v668, 0.0
      %v685 = vmax.f32 %v669, 0.0
      %v686 = vmax.f32 %v670, 0.0
      %v687 = vpack.c.bf16 %v671, %v671
      %v688 = vpack.c.bf16 %v672, %v672
      %v689 = vpack.c.bf16 %v673, %v673
      %v690 = vpack.c.bf16 %v674, %v674
      %v691 = vpack.c.bf16 %v675, %v675
      %v692 = vpack.c.bf16 %v676, %v676
      %v693 = vpack.c.bf16 %v677, %v677
      %v694 = vpack.c.bf16 %v678, %v678
      %v695 = vpack.c.bf16 %v679, %v679
      %v696 = vpack.c.bf16 %v680, %v680
      %v697 = vpack.c.bf16 %v681, %v681
      %v698 = vpack.c.bf16 %v682, %v682
      %v699 = vpack.c.bf16 %v683, %v683
      %v700 = vpack.c.bf16 %v684, %v684
      %v701 = vpack.c.bf16 %v685, %v685
      %v702 = vpack.c.bf16 %v686, %v686
      %703 = vst [vmem:[%s5] sm:$0xf] %v687
      %704 = vst [vmem:[%s5 + $0x4] sm:$0xf] %v688
      %705 = vst [vmem:[%s5 + $0x8] sm:$0xf] %v689
      %706 = vst [vmem:[%s5 + $0xc] sm:$0xf] %v690
      %707 = vst [vmem:[%s5 + $0x10] sm:$0xf] %v691
      %708 = vst [vmem:[%s5 + $0x14] sm:$0xf] %v692
      %709 = vst [vmem:[%s5 + $0x18] sm:$0xf] %v693
      %710 = vst [vmem:[%s5 + $0x1c] sm:$0xf] %v694
      %711 = vst [vmem:[%s5 + $0x20] sm:$0xf] %v695
      %712 = vst [vmem:[%s5 + $0x24] sm:$0xf] %v696
      %713 = vst [vmem:[%s5 + $0x28] sm:$0xf] %v697
      %714 = vst [vmem:[%s5 + $0x2c] sm:$0xf] %v698
      %715 = vst [vmem:[%s5 + $0x30] sm:$0xf] %v699
      %716 = vst [vmem:[%s5 + $0x34] sm:$0xf] %v700
      %717 = vst [vmem:[%s5 + $0x38] sm:$0xf] %v701
      %718 = vst [vmem:[%s5 + $0x3c] sm:$0xf] %v702
    $region111: #{sagenet_forward.5} parent=1 // pred_fallthru
      _
    // Predicated region
    $region112: #{sagenet_forward.5} parent=1 // pred_check
      _
    $region113: #{sagenet_forward.5} parent=1 // pred_check_branch
      %720 = sbr.rel (0) target = $region115
    $region114: #{sagenet_forward.5} parent=1 // pred_region
      _
    $region115: #{sagenet_forward.5} parent=1 // pred_fallthru
      _
    // Predicated region
    $region116: #{sagenet_forward.5} parent=1 // pred_check
      _
    $region117: #{sagenet_forward.5} parent=1 // pred_check_branch
      %722 = sbr.rel (0) target = $region119
    $region118: #{sagenet_forward.5} parent=1 // pred_region
      _
    $region119: #{sagenet_forward.5} parent=1 // pred_fallthru
      _

// kernel: sagenet_forward.7
$region0: #{sagenet_forward.7}
  #allocation0 [shape = 'u32[]', space=smem, size = 0x4, offset = 0x4, fixed_abs, tag = 'smem constant byte address 0x4 - core index']
  #allocation1 [shape = 'u32[72,128]{1,0:T(1,128)}', space=vmem, size = 0x9000, scoped, tag = 'internal scratch']
  #allocation2 [shape = 'f32[128,128]{1,0:T(8,128)}', space=vmem, size = 0x10000, scoped, tag = 'scratch operand']
  %s0 = inlined_call_operand.vmem [shape: bf16[128,128], index: 0, kind: input, shape index: {}]
  %s1 = inlined_call_operand.vmem [shape: bf16[128,256], index: 1, kind: input, shape index: {}, may-alias: {1,2}]
  %s2 = inlined_call_operand.vmem [shape: bf16[128,256], index: 2, kind: input, shape index: {}, may-alias: {1,2}]
  %s3 = inlined_call_operand.vmem [shape: f32[128,1], index: 3, kind: input, shape index: {}]
  %s4 = inlined_call_operand.vmem [shape: f32[1,128], index: 4, kind: input, shape index: {}]
  %s5 = inlined_call_operand.vmem [shape: bf16[128,128], index: 5, kind: input, shape index: {}]
  %s6 = inlined_call_operand.vmem [shape: f32[1,128], index: 6, kind: input, shape index: {}]
  %s7 = inlined_call_operand.vmem [shape: f32[128,128], index: 7, kind: output, shape index: {}]
  %s8 = sld [smem:[#allocation0]]
  $region128: #{sagenet_forward.7} parent=0
    _
  %s10 = ssub.s32 1, %s8
  %s11 = scalar_select 0, %s10, %s8
  $region1: #{sagenet_forward.7} parent=0
    #allocation3 [shape = 'u8[32768]{0}', space=vmem, size = 0x8000, scoped, tag = 'input window, operand 1, single buffered']
    #allocation4 [shape = 'u8[32768]{0}', space=vmem, size = 0x8000, scoped, tag = 'input window, operand 2, single buffered']
    // Predicated region
    $region2: #{sagenet_forward.7} parent=1 // pred_check
      _
    $region3: #{sagenet_forward.7} parent=1 // pred_check_branch
      %13 = sbr.rel (0) target = $region5
    $region4: #{sagenet_forward.7} parent=1 // pred_region
      _
    $region5: #{sagenet_forward.7} parent=1 // pred_fallthru
      _
    // Predicated region
    $region6: #{sagenet_forward.7} parent=1 // pred_check
      _
    $region7: #{sagenet_forward.7} parent=1 // pred_check_branch
      %15 = sbr.rel (0) target = $region9
    $region8: #{sagenet_forward.7} parent=1 // pred_region
      %s16 = scalar_lea.vmem %s1, 4
      // Predicated region
      $region10: #{sagenet_forward.7} parent=8 // pred_check
        _
      $region11: #{sagenet_forward.7} parent=8 // pred_check_branch
        %18 = sbr.rel (0) target = $region13
      $region12: #{sagenet_forward.7} parent=8 // pred_region
        // Predicated region
        $region14: #{sagenet_forward.7} parent=12 // pred_check
          _
        $region15: #{sagenet_forward.7} parent=12 // pred_check_branch
          %20 = sbr.rel target = $region17
        $region16: #{sagenet_forward.7} parent=12 // pred_region
          // Predicated region
          $region29: #{sagenet_forward.7} parent=16 // pred_check
            _
          $region30: #{sagenet_forward.7} parent=16 // pred_check_branch
            %66 = sbr.rel (0) target = $region32
          $region31: #{sagenet_forward.7} parent=16 // pred_region
            loop: start=0, step=1, limit=1
            $region33: #{sagenet_forward.7} parent=31 // loop_pre_header
              _
            $region34: #{sagenet_forward.7} parent=31 // loop_header
              %s68 = sphi 0, %s72
              %p69 = scmp.ge.s32.totalorder %s68, 1
              %s73 = sphi %s16, %s16
              %s74 = sphi [#allocation3], [#allocation3]
            $region35: #{sagenet_forward.7} parent=31 // loop_header_branch
              %71 = sbr.rel (%p69) target = $region39
            $region36: #{sagenet_forward.7} parent=31 // loop_body
              _
            $region37: #{sagenet_forward.7} parent=31 // loop_footer
              %s72 = sadd.s32 1, %s68
            $region38: #{sagenet_forward.7} parent=31 // loop_footer_branch
              %67 = sbr.rel target = $region34
            $region39: #{sagenet_forward.7} parent=31 // loop_exit
              _
            %s76 = ssub.s32 16, 1
            loop: start=0, step=1, limit=1
            $region40: #{sagenet_forward.7} parent=31 // loop_pre_header
              _
            $region41: #{sagenet_forward.7} parent=31 // loop_header
              %s78 = sphi 0, %s82
              %p79 = scmp.ge.s32.totalorder %s78, 1
              %s83 = sphi %s16, %s16
              %s84 = sphi [#allocation3], [#allocation3]
            $region42: #{sagenet_forward.7} parent=31 // loop_header_branch
              %81 = sbr.rel (%p79) target = $region46
            $region43: #{sagenet_forward.7} parent=31 // loop_body
              %v85 = vld [vmem:[%s83] sm:%s76]
              %86 = vst [vmem:[%s84] sm:%s76] %v85
              %v87 = vld [vmem:[%s83 + $0x8] sm:%s76]
              %88 = vst [vmem:[%s84 + $0x4] sm:%s76] %v87
              %v89 = vld [vmem:[%s83 + $0x10] sm:%s76]
              %90 = vst [vmem:[%s84 + $0x8] sm:%s76] %v89
              %v91 = vld [vmem:[%s83 + $0x18] sm:%s76]
              %92 = vst [vmem:[%s84 + $0xc] sm:%s76] %v91
              %v93 = vld [vmem:[%s83 + $0x20] sm:%s76]
              %94 = vst [vmem:[%s84 + $0x10] sm:%s76] %v93
              %v95 = vld [vmem:[%s83 + $0x28] sm:%s76]
              %96 = vst [vmem:[%s84 + $0x14] sm:%s76] %v95
              %v97 = vld [vmem:[%s83 + $0x30] sm:%s76]
              %98 = vst [vmem:[%s84 + $0x18] sm:%s76] %v97
              %v99 = vld [vmem:[%s83 + $0x38] sm:%s76]
              %100 = vst [vmem:[%s84 + $0x1c] sm:%s76] %v99
              %v101 = vld [vmem:[%s83 + $0x40] sm:%s76]
              %102 = vst [vmem:[%s84 + $0x20] sm:%s76] %v101
              %v103 = vld [vmem:[%s83 + $0x48] sm:%s76]
              %104 = vst [vmem:[%s84 + $0x24] sm:%s76] %v103
              %v105 = vld [vmem:[%s83 + $0x50] sm:%s76]
              %106 = vst [vmem:[%s84 + $0x28] sm:%s76] %v105
              %v107 = vld [vmem:[%s83 + $0x58] sm:%s76]
              %108 = vst [vmem:[%s84 + $0x2c] sm:%s76] %v107
              %v109 = vld [vmem:[%s83 + $0x60] sm:%s76]
              %110 = vst [vmem:[%s84 + $0x30] sm:%s76] %v109
              %v111 = vld [vmem:[%s83 + $0x68] sm:%s76]
              %112 = vst [vmem:[%s84 + $0x34] sm:%s76] %v111
              %v113 = vld [vmem:[%s83 + $0x70] sm:%s76]
              %114 = vst [vmem:[%s84 + $0x38] sm:%s76] %v113
              %v115 = vld [vmem:[%s83 + $0x78] sm:%s76]
              %116 = vst [vmem:[%s84 + $0x3c] sm:%s76] %v115
            $region44: #{sagenet_forward.7} parent=31 // loop_footer
              %s82 = sadd.s32 1, %s78
            $region45: #{sagenet_forward.7} parent=31 // loop_footer_branch
              %77 = sbr.rel target = $region41
            $region46: #{sagenet_forward.7} parent=31 // loop_exit
              _
          $region32: #{sagenet_forward.7} parent=16 // pred_fallthru
            _
        $region17: #{sagenet_forward.7} parent=12 // pred_fallthru
          _
        // Predicated region
        $region18: #{sagenet_forward.7} parent=12 // pred_check
          _
        $region19: #{sagenet_forward.7} parent=12 // pred_check_branch
          %22 = sbr.rel (0) target = $region21
        $region20: #{sagenet_forward.7} parent=12 // pred_region
          %s24 = ssub.s32 16, 1
          loop: start=0, step=1, limit=1
          $region22: #{sagenet_forward.7} parent=20 // loop_pre_header
            _
          $region23: #{sagenet_forward.7} parent=20 // loop_header
            %s26 = sphi 0, %s30
            %p27 = scmp.ge.s32.totalorder %s26, 1
            %s31 = sphi %s16, %s16
            %s32 = sphi [#allocation3], [#allocation3]
          $region24: #{sagenet_forward.7} parent=20 // loop_header_branch
            %29 = sbr.rel (%p27) target = $region28
          $region25: #{sagenet_forward.7} parent=20 // loop_body
            %v33 = vld [vmem:[%s31] sm:%s24]
            %34 = vst [vmem:[%s32] sm:%s24] %v33
            %v35 = vld [vmem:[%s31 + $0x8] sm:%s24]
            %36 = vst [vmem:[%s32 + $0x4] sm:%s24] %v35
            %v37 = vld [vmem:[%s31 + $0x10] sm:%s24]
            %38 = vst [vmem:[%s32 + $0x8] sm:%s24] %v37
            %v39 = vld [vmem:[%s31 + $0x18] sm:%s24]
            %40 = vst [vmem:[%s32 + $0xc] sm:%s24] %v39
            %v41 = vld [vmem:[%s31 + $0x20] sm:%s24]
            %42 = vst [vmem:[%s32 + $0x10] sm:%s24] %v41
            %v43 = vld [vmem:[%s31 + $0x28] sm:%s24]
            %44 = vst [vmem:[%s32 + $0x14] sm:%s24] %v43
            %v45 = vld [vmem:[%s31 + $0x30] sm:%s24]
            %46 = vst [vmem:[%s32 + $0x18] sm:%s24] %v45
            %v47 = vld [vmem:[%s31 + $0x38] sm:%s24]
            %48 = vst [vmem:[%s32 + $0x1c] sm:%s24] %v47
            %v49 = vld [vmem:[%s31 + $0x40] sm:%s24]
            %50 = vst [vmem:[%s32 + $0x20] sm:%s24] %v49
            %v51 = vld [vmem:[%s31 + $0x48] sm:%s24]
            %52 = vst [vmem:[%s32 + $0x24] sm:%s24] %v51
            %v53 = vld [vmem:[%s31 + $0x50] sm:%s24]
            %54 = vst [vmem:[%s32 + $0x28] sm:%s24] %v53
            %v55 = vld [vmem:[%s31 + $0x58] sm:%s24]
            %56 = vst [vmem:[%s32 + $0x2c] sm:%s24] %v55
            %v57 = vld [vmem:[%s31 + $0x60] sm:%s24]
            %58 = vst [vmem:[%s32 + $0x30] sm:%s24] %v57
            %v59 = vld [vmem:[%s31 + $0x68] sm:%s24]
            %60 = vst [vmem:[%s32 + $0x34] sm:%s24] %v59
            %v61 = vld [vmem:[%s31 + $0x70] sm:%s24]
            %62 = vst [vmem:[%s32 + $0x38] sm:%s24] %v61
            %v63 = vld [vmem:[%s31 + $0x78] sm:%s24]
            %64 = vst [vmem:[%s32 + $0x3c] sm:%s24] %v63
          $region26: #{sagenet_forward.7} parent=20 // loop_footer
            %s30 = sadd.s32 1, %s26
          $region27: #{sagenet_forward.7} parent=20 // loop_footer_branch
            %25 = sbr.rel target = $region23
          $region28: #{sagenet_forward.7} parent=20 // loop_exit
            _
        $region21: #{sagenet_forward.7} parent=12 // pred_fallthru
          _
      $region13: #{sagenet_forward.7} parent=8 // pred_fallthru
        _
      %117 = vnop
    $region9: #{sagenet_forward.7} parent=1 // pred_fallthru
      _
    // Predicated region
    $region47: #{sagenet_forward.7} parent=1 // pred_check
      _
    $region48: #{sagenet_forward.7} parent=1 // pred_check_branch
      %119 = sbr.rel (0) target = $region50
    $region49: #{sagenet_forward.7} parent=1 // pred_region
      // Predicated region
      $region51: #{sagenet_forward.7} parent=49 // pred_check
        _
      $region52: #{sagenet_forward.7} parent=49 // pred_check_branch
        %121 = sbr.rel (0) target = $region54
      $region53: #{sagenet_forward.7} parent=49 // pred_region
        // Predicated region
        $region55: #{sagenet_forward.7} parent=53 // pred_check
          _
        $region56: #{sagenet_forward.7} parent=53 // pred_check_branch
          %123 = sbr.rel target = $region58
        $region57: #{sagenet_forward.7} parent=53 // pred_region
          // Predicated region
          $region70: #{sagenet_forward.7} parent=57 // pred_check
            _
          $region71: #{sagenet_forward.7} parent=57 // pred_check_branch
            %169 = sbr.rel (0) target = $region73
          $region72: #{sagenet_forward.7} parent=57 // pred_region
            loop: start=0, step=1, limit=1
            $region74: #{sagenet_forward.7} parent=72 // loop_pre_header
              _
            $region75: #{sagenet_forward.7} parent=72 // loop_header
              %s171 = sphi 0, %s175
              %p172 = scmp.ge.s32.totalorder %s171, 1
              %s176 = sphi %s2, %s2
              %s177 = sphi [#allocation4], [#allocation4]
            $region76: #{sagenet_forward.7} parent=72 // loop_header_branch
              %174 = sbr.rel (%p172) target = $region80
            $region77: #{sagenet_forward.7} parent=72 // loop_body
              _
            $region78: #{sagenet_forward.7} parent=72 // loop_footer
              %s175 = sadd.s32 1, %s171
            $region79: #{sagenet_forward.7} parent=72 // loop_footer_branch
              %170 = sbr.rel target = $region75
            $region80: #{sagenet_forward.7} parent=72 // loop_exit
              _
            %s179 = ssub.s32 16, 1
            loop: start=0, step=1, limit=1
            $region81: #{sagenet_forward.7} parent=72 // loop_pre_header
              _
            $region82: #{sagenet_forward.7} parent=72 // loop_header
              %s181 = sphi 0, %s185
              %p182 = scmp.ge.s32.totalorder %s181, 1
              %s186 = sphi %s2, %s2
              %s187 = sphi [#allocation4], [#allocation4]
            $region83: #{sagenet_forward.7} parent=72 // loop_header_branch
              %184 = sbr.rel (%p182) target = $region87
            $region84: #{sagenet_forward.7} parent=72 // loop_body
              %v188 = vld [vmem:[%s186] sm:%s179]
              %189 = vst [vmem:[%s187] sm:%s179] %v188
              %v190 = vld [vmem:[%s186 + $0x8] sm:%s179]
              %191 = vst [vmem:[%s187 + $0x4] sm:%s179] %v190
              %v192 = vld [vmem:[%s186 + $0x10] sm:%s179]
              %193 = vst [vmem:[%s187 + $0x8] sm:%s179] %v192
              %v194 = vld [vmem:[%s186 + $0x18] sm:%s179]
              %195 = vst [vmem:[%s187 + $0xc] sm:%s179] %v194
              %v196 = vld [vmem:[%s186 + $0x20] sm:%s179]
              %197 = vst [vmem:[%s187 + $0x10] sm:%s179] %v196
              %v198 = vld [vmem:[%s186 + $0x28] sm:%s179]
              %199 = vst [vmem:[%s187 + $0x14] sm:%s179] %v198
              %v200 = vld [vmem:[%s186 + $0x30] sm:%s179]
              %201 = vst [vmem:[%s187 + $0x18] sm:%s179] %v200
              %v202 = vld [vmem:[%s186 + $0x38] sm:%s179]
              %203 = vst [vmem:[%s187 + $0x1c] sm:%s179] %v202
              %v204 = vld [vmem:[%s186 + $0x40] sm:%s179]
              %205 = vst [vmem:[%s187 + $0x20] sm:%s179] %v204
              %v206 = vld [vmem:[%s186 + $0x48] sm:%s179]
              %207 = vst [vmem:[%s187 + $0x24] sm:%s179] %v206
              %v208 = vld [vmem:[%s186 + $0x50] sm:%s179]
              %209 = vst [vmem:[%s187 + $0x28] sm:%s179] %v208
              %v210 = vld [vmem:[%s186 + $0x58] sm:%s179]
              %211 = vst [vmem:[%s187 + $0x2c] sm:%s179] %v210
              %v212 = vld [vmem:[%s186 + $0x60] sm:%s179]
              %213 = vst [vmem:[%s187 + $0x30] sm:%s179] %v212
              %v214 = vld [vmem:[%s186 + $0x68] sm:%s179]
              %215 = vst [vmem:[%s187 + $0x34] sm:%s179] %v214
              %v216 = vld [vmem:[%s186 + $0x70] sm:%s179]
              %217 = vst [vmem:[%s187 + $0x38] sm:%s179] %v216
              %v218 = vld [vmem:[%s186 + $0x78] sm:%s179]
              %219 = vst [vmem:[%s187 + $0x3c] sm:%s179] %v218
            $region85: #{sagenet_forward.7} parent=72 // loop_footer
              %s185 = sadd.s32 1, %s181
            $region86: #{sagenet_forward.7} parent=72 // loop_footer_branch
              %180 = sbr.rel target = $region82
            $region87: #{sagenet_forward.7} parent=72 // loop_exit
              _
          $region73: #{sagenet_forward.7} parent=57 // pred_fallthru
            _
        $region58: #{sagenet_forward.7} parent=53 // pred_fallthru
          _
        // Predicated region
        $region59: #{sagenet_forward.7} parent=53 // pred_check
          _
        $region60: #{sagenet_forward.7} parent=53 // pred_check_branch
          %125 = sbr.rel (0) target = $region62
        $region61: #{sagenet_forward.7} parent=53 // pred_region
          %s127 = ssub.s32 16, 1
          loop: start=0, step=1, limit=1
          $region63: #{sagenet_forward.7} parent=61 // loop_pre_header
            _
          $region64: #{sagenet_forward.7} parent=61 // loop_header
            %s129 = sphi 0, %s133
            %p130 = scmp.ge.s32.totalorder %s129, 1
            %s134 = sphi %s2, %s2
            %s135 = sphi [#allocation4], [#allocation4]
          $region65: #{sagenet_forward.7} parent=61 // loop_header_branch
            %132 = sbr.rel (%p130) target = $region69
          $region66: #{sagenet_forward.7} parent=61 // loop_body
            %v136 = vld [vmem:[%s134] sm:%s127]
            %137 = vst [vmem:[%s135] sm:%s127] %v136
            %v138 = vld [vmem:[%s134 + $0x8] sm:%s127]
            %139 = vst [vmem:[%s135 + $0x4] sm:%s127] %v138
            %v140 = vld [vmem:[%s134 + $0x10] sm:%s127]
            %141 = vst [vmem:[%s135 + $0x8] sm:%s127] %v140
            %v142 = vld [vmem:[%s134 + $0x18] sm:%s127]
            %143 = vst [vmem:[%s135 + $0xc] sm:%s127] %v142
            %v144 = vld [vmem:[%s134 + $0x20] sm:%s127]
            %145 = vst [vmem:[%s135 + $0x10] sm:%s127] %v144
            %v146 = vld [vmem:[%s134 + $0x28] sm:%s127]
            %147 = vst [vmem:[%s135 + $0x14] sm:%s127] %v146
            %v148 = vld [vmem:[%s134 + $0x30] sm:%s127]
            %149 = vst [vmem:[%s135 + $0x18] sm:%s127] %v148
            %v150 = vld [vmem:[%s134 + $0x38] sm:%s127]
            %151 = vst [vmem:[%s135 + $0x1c] sm:%s127] %v150
            %v152 = vld [vmem:[%s134 + $0x40] sm:%s127]
            %153 = vst [vmem:[%s135 + $0x20] sm:%s127] %v152
            %v154 = vld [vmem:[%s134 + $0x48] sm:%s127]
            %155 = vst [vmem:[%s135 + $0x24] sm:%s127] %v154
            %v156 = vld [vmem:[%s134 + $0x50] sm:%s127]
            %157 = vst [vmem:[%s135 + $0x28] sm:%s127] %v156
            %v158 = vld [vmem:[%s134 + $0x58] sm:%s127]
            %159 = vst [vmem:[%s135 + $0x2c] sm:%s127] %v158
            %v160 = vld [vmem:[%s134 + $0x60] sm:%s127]
            %161 = vst [vmem:[%s135 + $0x30] sm:%s127] %v160
            %v162 = vld [vmem:[%s134 + $0x68] sm:%s127]
            %163 = vst [vmem:[%s135 + $0x34] sm:%s127] %v162
            %v164 = vld [vmem:[%s134 + $0x70] sm:%s127]
            %165 = vst [vmem:[%s135 + $0x38] sm:%s127] %v164
            %v166 = vld [vmem:[%s134 + $0x78] sm:%s127]
            %167 = vst [vmem:[%s135 + $0x3c] sm:%s127] %v166
          $region67: #{sagenet_forward.7} parent=61 // loop_footer
            %s133 = sadd.s32 1, %s129
          $region68: #{sagenet_forward.7} parent=61 // loop_footer_branch
            %128 = sbr.rel target = $region64
          $region69: #{sagenet_forward.7} parent=61 // loop_exit
            _
        $region62: #{sagenet_forward.7} parent=53 // pred_fallthru
          _
      $region54: #{sagenet_forward.7} parent=49 // pred_fallthru
        _
      %220 = vnop
    $region50: #{sagenet_forward.7} parent=1 // pred_fallthru
      _
    // Predicated region
    $region88: #{sagenet_forward.7} parent=1 // pred_check
      _
    $region89: #{sagenet_forward.7} parent=1 // pred_check_branch
      %222 = sbr.rel (0) target = $region91
    $region90: #{sagenet_forward.7} parent=1 // pred_region
      _
    $region91: #{sagenet_forward.7} parent=1 // pred_fallthru
      _
    // Predicated region
    $region92: #{sagenet_forward.7} parent=1 // pred_check
      _
    $region93: #{sagenet_forward.7} parent=1 // pred_check_branch
      %224 = sbr.rel (0) target = $region95
    $region94: #{sagenet_forward.7} parent=1 // pred_region
      _
    $region95: #{sagenet_forward.7} parent=1 // pred_fallthru
      _
    // Predicated region
    $region96: #{sagenet_forward.7} parent=1 // pred_check
      _
    $region97: #{sagenet_forward.7} parent=1 // pred_check_branch
      %226 = sbr.rel (0) target = $region99
    $region98: #{sagenet_forward.7} parent=1 // pred_region
      _
    $region99: #{sagenet_forward.7} parent=1 // pred_fallthru
      _
    // Predicated region
    $region100: #{sagenet_forward.7} parent=1 // pred_check
      _
    $region101: #{sagenet_forward.7} parent=1 // pred_check_branch
      %228 = sbr.rel (0) target = $region103
    $region102: #{sagenet_forward.7} parent=1 // pred_region
      _
    $region103: #{sagenet_forward.7} parent=1 // pred_fallthru
      _
    // Predicated region
    $region104: #{sagenet_forward.7} parent=1 // pred_check
      _
    $region105: #{sagenet_forward.7} parent=1 // pred_check_branch
      %230 = sbr.rel (0) target = $region107
    $region106: #{sagenet_forward.7} parent=1 // pred_region
      _
    $region107: #{sagenet_forward.7} parent=1 // pred_fallthru
      _
    // Predicated region
    $region108: #{sagenet_forward.7} parent=1 // pred_check
      _
    $region109: #{sagenet_forward.7} parent=1 // pred_check_branch
      %232 = sbr.rel (0) target = $region111
    $region110: #{sagenet_forward.7} parent=1 // pred_region
      _
    $region111: #{sagenet_forward.7} parent=1 // pred_fallthru
      _
    %p233 = scmp.eq.s32.totalorder 0, 0
    // Predicated region
    $region112: #{sagenet_forward.7} parent=1 // pred_check
      %p234 = pneg %p233
    $region113: #{sagenet_forward.7} parent=1 // pred_check_branch
      %236 = sbr.rel (%p234) target = $region115
    $region114: #{sagenet_forward.7} parent=1 // pred_region
      %237 = vst [vmem:[#allocation2] sm:$0xff] 0.0
      %238 = vst [vmem:[#allocation2 + $0x8] sm:$0xff] 0.0
      %239 = vst [vmem:[#allocation2 + $0x10] sm:$0xff] 0.0
      %240 = vst [vmem:[#allocation2 + $0x18] sm:$0xff] 0.0
      %241 = vst [vmem:[#allocation2 + $0x20] sm:$0xff] 0.0
      %242 = vst [vmem:[#allocation2 + $0x28] sm:$0xff] 0.0
      %243 = vst [vmem:[#allocation2 + $0x30] sm:$0xff] 0.0
      %244 = vst [vmem:[#allocation2 + $0x38] sm:$0xff] 0.0
      %245 = vst [vmem:[#allocation2 + $0x40] sm:$0xff] 0.0
      %246 = vst [vmem:[#allocation2 + $0x48] sm:$0xff] 0.0
      %247 = vst [vmem:[#allocation2 + $0x50] sm:$0xff] 0.0
      %248 = vst [vmem:[#allocation2 + $0x58] sm:$0xff] 0.0
      %249 = vst [vmem:[#allocation2 + $0x60] sm:$0xff] 0.0
      %250 = vst [vmem:[#allocation2 + $0x68] sm:$0xff] 0.0
      %251 = vst [vmem:[#allocation2 + $0x70] sm:$0xff] 0.0
      %252 = vst [vmem:[#allocation2 + $0x78] sm:$0xff] 0.0
    $region115: #{sagenet_forward.7} parent=1 // pred_fallthru
      _
    %v253 = vld [vmem:[#allocation2] sm:$0xff]
    %v254 = vld [vmem:[#allocation2 + $0x8] sm:$0xff]
    %v255 = vld [vmem:[#allocation2 + $0x10] sm:$0xff]
    %v256 = vld [vmem:[#allocation2 + $0x18] sm:$0xff]
    %v257 = vld [vmem:[#allocation2 + $0x20] sm:$0xff]
    %v258 = vld [vmem:[#allocation2 + $0x28] sm:$0xff]
    %v259 = vld [vmem:[#allocation2 + $0x30] sm:$0xff]
    %v260 = vld [vmem:[#allocation2 + $0x38] sm:$0xff]
    %v261 = vld [vmem:[#allocation2 + $0x40] sm:$0xff]
    %v262 = vld [vmem:[#allocation2 + $0x48] sm:$0xff]
    %v263 = vld [vmem:[#allocation2 + $0x50] sm:$0xff]
    %v264 = vld [vmem:[#allocation2 + $0x58] sm:$0xff]
    %v265 = vld [vmem:[#allocation2 + $0x60] sm:$0xff]
    %v266 = vld [vmem:[#allocation2 + $0x68] sm:$0xff]
    %v267 = vld [vmem:[#allocation2 + $0x70] sm:$0xff]
    %v268 = vld [vmem:[#allocation2 + $0x78] sm:$0xff]
    %v269 = vld [vmem:[%s0] sm:$0xf]
    %v270 = vld [vmem:[%s0 + $0x4] sm:$0xf]
    %v271 = vld [vmem:[%s0 + $0x8] sm:$0xf]
    %v272 = vld [vmem:[%s0 + $0xc] sm:$0xf]
    %v273 = vld [vmem:[%s0 + $0x10] sm:$0xf]
    %v274 = vld [vmem:[%s0 + $0x14] sm:$0xf]
    %v275 = vld [vmem:[%s0 + $0x18] sm:$0xf]
    %v276 = vld [vmem:[%s0 + $0x1c] sm:$0xf]
    %v277 = vld [vmem:[%s0 + $0x20] sm:$0xf]
    %v278 = vld [vmem:[%s0 + $0x24] sm:$0xf]
    %v279 = vld [vmem:[%s0 + $0x28] sm:$0xf]
    %v280 = vld [vmem:[%s0 + $0x2c] sm:$0xf]
    %v281 = vld [vmem:[%s0 + $0x30] sm:$0xf]
    %v282 = vld [vmem:[%s0 + $0x34] sm:$0xf]
    %v283 = vld [vmem:[%s0 + $0x38] sm:$0xf]
    %v284 = vld [vmem:[%s0 + $0x3c] sm:$0xf]
    %v285 = vld [vmem:[#allocation3] sm:$0xf]
    %v286 = vld [vmem:[#allocation3 + $0x4] sm:$0xf]
    %v287 = vld [vmem:[#allocation3 + $0x8] sm:$0xf]
    %v288 = vld [vmem:[#allocation3 + $0xc] sm:$0xf]
    %v289 = vld [vmem:[#allocation3 + $0x10] sm:$0xf]
    %v290 = vld [vmem:[#allocation3 + $0x14] sm:$0xf]
    %v291 = vld [vmem:[#allocation3 + $0x18] sm:$0xf]
    %v292 = vld [vmem:[#allocation3 + $0x1c] sm:$0xf]
    %v293 = vld [vmem:[#allocation3 + $0x20] sm:$0xf]
    %v294 = vld [vmem:[#allocation3 + $0x24] sm:$0xf]
    %v295 = vld [vmem:[#allocation3 + $0x28] sm:$0xf]
    %v296 = vld [vmem:[#allocation3 + $0x2c] sm:$0xf]
    %v297 = vld [vmem:[#allocation3 + $0x30] sm:$0xf]
    %v298 = vld [vmem:[#allocation3 + $0x34] sm:$0xf]
    %v299 = vld [vmem:[#allocation3 + $0x38] sm:$0xf]
    %v300 = vld [vmem:[#allocation3 + $0x3c] sm:$0xf]
    %v317 = vunpack.c.l.b16 %v269
    %v318 = vunpack.c.l.b16 %v270
    %v319 = vunpack.c.l.b16 %v271
    %v320 = vunpack.c.l.b16 %v272
    %v321 = vunpack.c.l.b16 %v273
    %v322 = vunpack.c.l.b16 %v274
    %v323 = vunpack.c.l.b16 %v275
    %v324 = vunpack.c.l.b16 %v276
    %v325 = vunpack.c.l.b16 %v277
    %v326 = vunpack.c.l.b16 %v278
    %v327 = vunpack.c.l.b16 %v279
    %v328 = vunpack.c.l.b16 %v280
    %v329 = vunpack.c.l.b16 %v281
    %v330 = vunpack.c.l.b16 %v282
    %v331 = vunpack.c.l.b16 %v283
    %v332 = vunpack.c.l.b16 %v284
    %v333 = vpack.c.b16 %v318, %v317
    %v334 = vpack.c.b16 %v320, %v319
    %v335 = vpack.c.b16 %v322, %v321
    %v336 = vpack.c.b16 %v324, %v323
    %v337 = vpack.c.b16 %v326, %v325
    %v338 = vpack.c.b16 %v328, %v327
    %v339 = vpack.c.b16 %v330, %v329
    %v340 = vpack.c.b16 %v332, %v331
    %v365 = vunpack.c.l.b16 %v285
    %v366 = vunpack.c.l.b16 %v286
    %v367 = vunpack.c.l.b16 %v287
    %v368 = vunpack.c.l.b16 %v288
    %v369 = vunpack.c.l.b16 %v289
    %v370 = vunpack.c.l.b16 %v290
    %v371 = vunpack.c.l.b16 %v291
    %v372 = vunpack.c.l.b16 %v292
    %v373 = vunpack.c.l.b16 %v293
    %v374 = vunpack.c.l.b16 %v294
    %v375 = vunpack.c.l.b16 %v295
    %v376 = vunpack.c.l.b16 %v296
    %v377 = vunpack.c.l.b16 %v297
    %v378 = vunpack.c.l.b16 %v298
    %v379 = vunpack.c.l.b16 %v299
    %v380 = vunpack.c.l.b16 %v300
    %v381 = vpack.c.b16 %v366, %v365
    %v382 = vpack.c.b16 %v368, %v367
    %v383 = vpack.c.b16 %v370, %v369
    %v384 = vpack.c.b16 %v372, %v371
    %v385 = vpack.c.b16 %v374, %v373
    %v386 = vpack.c.b16 %v376, %v375
    %v387 = vpack.c.b16 %v378, %v377
    %v388 = vpack.c.b16 %v380, %v379
    %397 = vmatpush.bf16.msra.mxu0 %v388
    %398 = vmatpush.bf16.msra.mxu0 %v387
    %399 = vmatpush.bf16.msra.mxu0 %v386
    %400 = vmatpush.bf16.msra.mxu0 %v385
    %401 = vmatpush.bf16.msra.mxu0 %v384
    %402 = vmatpush.bf16.msra.mxu0 %v383
    %403 = vmatpush.bf16.msra.mxu0 %v382
    %404 = vmatpush.bf16.msra.mxu0 %v381
    %405 = vmatmul.bf16.gmra.mxu0 %v333
    %v406 = vpop.f32.mrf.mxu0
    %v407 = vadd.f32 0.0, %v406
    %v408 = vpop.f32.mrf.mxu0
    %v409 = vadd.f32 0.0, %v408
    %410 = vmatmul.bf16.gmra.mxu0 %v334
    %v411 = vpop.f32.mrf.mxu0
    %v412 = vadd.f32 0.0, %v411
    %v413 = vpop.f32.mrf.mxu0
    %v414 = vadd.f32 0.0, %v413
    %415 = vmatmul.bf16.gmra.mxu0 %v335
    %v416 = vpop.f32.mrf.mxu0
    %v417 = vadd.f32 0.0, %v416
    %v418 = vpop.f32.mrf.mxu0
    %v419 = vadd.f32 0.0, %v418
    %420 = vmatmul.bf16.gmra.mxu0 %v336
    %v421 = vpop.f32.mrf.mxu0
    %v422 = vadd.f32 0.0, %v421
    %v423 = vpop.f32.mrf.mxu0
    %v424 = vadd.f32 0.0, %v423
    %425 = vmatmul.bf16.gmra.mxu0 %v337
    %v426 = vpop.f32.mrf.mxu0
    %v427 = vadd.f32 0.0, %v426
    %v428 = vpop.f32.mrf.mxu0
    %v429 = vadd.f32 0.0, %v428
    %430 = vmatmul.bf16.gmra.mxu0 %v338
    %v431 = vpop.f32.mrf.mxu0
    %v432 = vadd.f32 0.0, %v431
    %v433 = vpop.f32.mrf.mxu0
    %v434 = vadd.f32 0.0, %v433
    %435 = vmatmul.bf16.gmra.mxu0 %v339
    %v436 = vpop.f32.mrf.mxu0
    %v437 = vadd.f32 0.0, %v436
    %v438 = vpop.f32.mrf.mxu0
    %v439 = vadd.f32 0.0, %v438
    %440 = vmatmul.bf16.gmra.mxu0 %v340
    %v441 = vpop.f32.mrf.mxu0
    %v442 = vadd.f32 0.0, %v441
    %v443 = vpop.f32.mrf.mxu0
    %v444 = vadd.f32 0.0, %v443
    %445 = vdwg.mxu0
    %v446 = vadd.f32 %v253, %v407
    %v447 = vadd.f32 %v254, %v409
    %v448 = vadd.f32 %v255, %v412
    %v449 = vadd.f32 %v256, %v414
    %v450 = vadd.f32 %v257, %v417
    %v451 = vadd.f32 %v258, %v419
    %v452 = vadd.f32 %v259, %v422
    %v453 = vadd.f32 %v260, %v424
    %v454 = vadd.f32 %v261, %v427
    %v455 = vadd.f32 %v262, %v429
    %v456 = vadd.f32 %v263, %v432
    %v457 = vadd.f32 %v264, %v434
    %v458 = vadd.f32 %v265, %v437
    %v459 = vadd.f32 %v266, %v439
    %v460 = vadd.f32 %v267, %v442
    %v461 = vadd.f32 %v268, %v444
    %462 = vst [vmem:[#allocation2] sm:$0xff] %v446
    %463 = vst [vmem:[#allocation2 + $0x8] sm:$0xff] %v447
    %464 = vst [vmem:[#allocation2 + $0x10] sm:$0xff] %v448
    %465 = vst [vmem:[#allocation2 + $0x18] sm:$0xff] %v449
    %466 = vst [vmem:[#allocation2 + $0x20] sm:$0xff] %v450
    %467 = vst [vmem:[#allocation2 + $0x28] sm:$0xff] %v451
    %468 = vst [vmem:[#allocation2 + $0x30] sm:$0xff] %v452
    %469 = vst [vmem:[#allocation2 + $0x38] sm:$0xff] %v453
    %470 = vst [vmem:[#allocation2 + $0x40] sm:$0xff] %v454
    %471 = vst [vmem:[#allocation2 + $0x48] sm:$0xff] %v455
    %472 = vst [vmem:[#allocation2 + $0x50] sm:$0xff] %v456
    %473 = vst [vmem:[#allocation2 + $0x58] sm:$0xff] %v457
    %474 = vst [vmem:[#allocation2 + $0x60] sm:$0xff] %v458
    %475 = vst [vmem:[#allocation2 + $0x68] sm:$0xff] %v459
    %476 = vst [vmem:[#allocation2 + $0x70] sm:$0xff] %v460
    %477 = vst [vmem:[#allocation2 + $0x78] sm:$0xff] %v461
    // Predicated region
    $region116: #{sagenet_forward.7} parent=1 // pred_check
      %p478 = pneg %p233
    $region117: #{sagenet_forward.7} parent=1 // pred_check_branch
      %480 = sbr.rel (%p478) target = $region119
    $region118: #{sagenet_forward.7} parent=1 // pred_region
      %v481 = vld [vmem:[#allocation4] sm:$0xf]
      %v482 = vld [vmem:[#allocation4 + $0x4] sm:$0xf]
      %v483 = vld [vmem:[#allocation4 + $0x8] sm:$0xf]
      %v484 = vld [vmem:[#allocation4 + $0xc] sm:$0xf]
      %v485 = vld [vmem:[#allocation4 + $0x10] sm:$0xf]
      %v486 = vld [vmem:[#allocation4 + $0x14] sm:$0xf]
      %v487 = vld [vmem:[#allocation4 + $0x18] sm:$0xf]
      %v488 = vld [vmem:[#allocation4 + $0x1c] sm:$0xf]
      %v489 = vld [vmem:[#allocation4 + $0x20] sm:$0xf]
      %v490 = vld [vmem:[#allocation4 + $0x24] sm:$0xf]
      %v491 = vld [vmem:[#allocation4 + $0x28] sm:$0xf]
      %v492 = vld [vmem:[#allocation4 + $0x2c] sm:$0xf]
      %v493 = vld [vmem:[#allocation4 + $0x30] sm:$0xf]
      %v494 = vld [vmem:[#allocation4 + $0x34] sm:$0xf]
      %v495 = vld [vmem:[#allocation4 + $0x38] sm:$0xf]
      %v496 = vld [vmem:[#allocation4 + $0x3c] sm:$0xf]
      %v497 = vunpack.c.l.bf16 %v481
      %v498 = vunpack.c.l.bf16 %v482
      %v499 = vunpack.c.l.bf16 %v483
      %v500 = vunpack.c.l.bf16 %v484
      %v501 = vunpack.c.l.bf16 %v485
      %v502 = vunpack.c.l.bf16 %v486
      %v503 = vunpack.c.l.bf16 %v487
      %v504 = vunpack.c.l.bf16 %v488
      %v505 = vunpack.c.l.bf16 %v489
      %v506 = vunpack.c.l.bf16 %v490
      %v507 = vunpack.c.l.bf16 %v491
      %v508 = vunpack.c.l.bf16 %v492
      %v509 = vunpack.c.l.bf16 %v493
      %v510 = vunpack.c.l.bf16 %v494
      %v511 = vunpack.c.l.bf16 %v495
      %v512 = vunpack.c.l.bf16 %v496
      %v513 = vld [vmem:[%s3] sm:$0xff]
      %v514 = vld [vmem:[%s3 + $0x8] sm:$0xff]
      %v515 = vld [vmem:[%s3 + $0x10] sm:$0xff]
      %v516 = vld [vmem:[%s3 + $0x18] sm:$0xff]
      %v517 = vld [vmem:[%s3 + $0x20] sm:$0xff]
      %v518 = vld [vmem:[%s3 + $0x28] sm:$0xff]
      %v519 = vld [vmem:[%s3 + $0x30] sm:$0xff]
      %v520 = vld [vmem:[%s3 + $0x38] sm:$0xff]
      %v521 = vld [vmem:[%s3 + $0x40] sm:$0xff]
      %v522 = vld [vmem:[%s3 + $0x48] sm:$0xff]
      %v523 = vld [vmem:[%s3 + $0x50] sm:$0xff]
      %v524 = vld [vmem:[%s3 + $0x58] sm:$0xff]
      %v525 = vld [vmem:[%s3 + $0x60] sm:$0xff]
      %v526 = vld [vmem:[%s3 + $0x68] sm:$0xff]
      %v527 = vld [vmem:[%s3 + $0x70] sm:$0xff]
      %v528 = vld [vmem:[%s3 + $0x78] sm:$0xff]
      %v529 = vld [vmem:[#allocation2] sm:$0xff]
      %v530 = vld [vmem:[#allocation2 + $0x8] sm:$0xff]
      %v531 = vld [vmem:[#allocation2 + $0x10] sm:$0xff]
      %v532 = vld [vmem:[#allocation2 + $0x18] sm:$0xff]
      %v533 = vld [vmem:[#allocation2 + $0x20] sm:$0xff]
      %v534 = vld [vmem:[#allocation2 + $0x28] sm:$0xff]
      %v535 = vld [vmem:[#allocation2 + $0x30] sm:$0xff]
      %v536 = vld [vmem:[#allocation2 + $0x38] sm:$0xff]
      %v537 = vld [vmem:[#allocation2 + $0x40] sm:$0xff]
      %v538 = vld [vmem:[#allocation2 + $0x48] sm:$0xff]
      %v539 = vld [vmem:[#allocation2 + $0x50] sm:$0xff]
      %v540 = vld [vmem:[#allocation2 + $0x58] sm:$0xff]
      %v541 = vld [vmem:[#allocation2 + $0x60] sm:$0xff]
      %v542 = vld [vmem:[#allocation2 + $0x68] sm:$0xff]
      %v543 = vld [vmem:[#allocation2 + $0x70] sm:$0xff]
      %v544 = vld [vmem:[#allocation2 + $0x78] sm:$0xff]
      %546 = vset.pattern.permute.xlu0 0
      %547 = vperm.xlu0 %546, %v513
      %v548 = vpop.permute.xlu0 %547
      %551 = vset.pattern.permute.xlu0 0
      %552 = vperm.xlu0 %551, %v514
      %v553 = vpop.permute.xlu0 %552
      %556 = vset.pattern.permute.xlu0 0
      %557 = vperm.xlu0 %556, %v515
      %v558 = vpop.permute.xlu0 %557
      %561 = vset.pattern.permute.xlu0 0
      %562 = vperm.xlu0 %561, %v516
      %v563 = vpop.permute.xlu0 %562
      %566 = vset.pattern.permute.xlu0 0
      %567 = vperm.xlu0 %566, %v517
      %v568 = vpop.permute.xlu0 %567
      %571 = vset.pattern.permute.xlu0 0
      %572 = vperm.xlu0 %571, %v518
      %v573 = vpop.permute.xlu0 %572
      %576 = vset.pattern.permute.xlu0 0
      %577 = vperm.xlu0 %576, %v519
      %v578 = vpop.permute.xlu0 %577
      %581 = vset.pattern.permute.xlu0 0
      %582 = vperm.xlu0 %581, %v520
      %v583 = vpop.permute.xlu0 %582
      %586 = vset.pattern.permute.xlu0 0
      %587 = vperm.xlu0 %586, %v521
      %v588 = vpop.permute.xlu0 %587
      %591 = vset.pattern.permute.xlu0 0
      %592 = vperm.xlu0 %591, %v522
      %v593 = vpop.permute.xlu0 %592
      %596 = vset.pattern.permute.xlu0 0
      %597 = vperm.xlu0 %596, %v523
      %v598 = vpop.permute.xlu0 %597
      %601 = vset.pattern.permute.xlu0 0
      %602 = vperm.xlu0 %601, %v524
      %v603 = vpop.permute.xlu0 %602
      %606 = vset.pattern.permute.xlu0 0
      %607 = vperm.xlu0 %606, %v525
      %v608 = vpop.permute.xlu0 %607
      %611 = vset.pattern.permute.xlu0 0
      %612 = vperm.xlu0 %611, %v526
      %v613 = vpop.permute.xlu0 %612
      %616 = vset.pattern.permute.xlu0 0
      %617 = vperm.xlu0 %616, %v527
      %v618 = vpop.permute.xlu0 %617
      %621 = vset.pattern.permute.xlu0 0
      %622 = vperm.xlu0 %621, %v528
      %v623 = vpop.permute.xlu0 %622
      %v625 = vmul.f32 %v548, %v529
      %v626 = vmul.f32 %v553, %v530
      %v627 = vmul.f32 %v558, %v531
      %v628 = vmul.f32 %v563, %v532
      %v629 = vmul.f32 %v568, %v533
      %v630 = vmul.f32 %v573, %v534
      %v631 = vmul.f32 %v578, %v535
      %v632 = vmul.f32 %v583, %v536
      %v633 = vmul.f32 %v588, %v537
      %v634 = vmul.f32 %v593, %v538
      %v635 = vmul.f32 %v598, %v539
      %v636 = vmul.f32 %v603, %v540
      %v637 = vmul.f32 %v608, %v541
      %v638 = vmul.f32 %v613, %v542
      %v639 = vmul.f32 %v618, %v543
      %v640 = vmul.f32 %v623, %v544
      %v641 = vadd.f32 %v497, %v625
      %v642 = vadd.f32 %v498, %v626
      %v643 = vadd.f32 %v499, %v627
      %v644 = vadd.f32 %v500, %v628
      %v645 = vadd.f32 %v501, %v629
      %v646 = vadd.f32 %v502, %v630
      %v647 = vadd.f32 %v503, %v631
      %v648 = vadd.f32 %v504, %v632
      %v649 = vadd.f32 %v505, %v633
      %v650 = vadd.f32 %v506, %v634
      %v651 = vadd.f32 %v507, %v635
      %v652 = vadd.f32 %v508, %v636
      %v653 = vadd.f32 %v509, %v637
      %v654 = vadd.f32 %v510, %v638
      %v655 = vadd.f32 %v511, %v639
      %v656 = vadd.f32 %v512, %v640
      %v657 = vld [vmem:[%s4] sm:$0x1]
      %v659 = vperm.slane %v657, 0
      %v661 = vadd.f32 %v641, %v659
      %v662 = vadd.f32 %v642, %v659
      %v663 = vadd.f32 %v643, %v659
      %v664 = vadd.f32 %v644, %v659
      %v665 = vadd.f32 %v645, %v659
      %v666 = vadd.f32 %v646, %v659
      %v667 = vadd.f32 %v647, %v659
      %v668 = vadd.f32 %v648, %v659
      %v669 = vadd.f32 %v649, %v659
      %v670 = vadd.f32 %v650, %v659
      %v671 = vadd.f32 %v651, %v659
      %v672 = vadd.f32 %v652, %v659
      %v673 = vadd.f32 %v653, %v659
      %v674 = vadd.f32 %v654, %v659
      %v675 = vadd.f32 %v655, %v659
      %v676 = vadd.f32 %v656, %v659
      %v677 = vmax.f32 %v661, 0.0
      %v678 = vmax.f32 %v662, 0.0
      %v679 = vmax.f32 %v663, 0.0
      %v680 = vmax.f32 %v664, 0.0
      %v681 = vmax.f32 %v665, 0.0
      %v682 = vmax.f32 %v666, 0.0
      %v683 = vmax.f32 %v667, 0.0
      %v684 = vmax.f32 %v668, 0.0
      %v685 = vmax.f32 %v669, 0.0
      %v686 = vmax.f32 %v670, 0.0
      %v687 = vmax.f32 %v671, 0.0
      %v688 = vmax.f32 %v672, 0.0
      %v689 = vmax.f32 %v673, 0.0
      %v690 = vmax.f32 %v674, 0.0
      %v691 = vmax.f32 %v675, 0.0
      %v692 = vmax.f32 %v676, 0.0
      %v693 = vpack.c.bf16 %v678, %v677
      %v694 = vpack.c.bf16 %v680, %v679
      %v695 = vpack.c.bf16 %v682, %v681
      %v696 = vpack.c.bf16 %v684, %v683
      %v697 = vpack.c.bf16 %v686, %v685
      %v698 = vpack.c.bf16 %v688, %v687
      %v699 = vpack.c.bf16 %v690, %v689
      %v700 = vpack.c.bf16 %v692, %v691
      %v701 = vld [vmem:[%s5] sm:$0xf]
      %v702 = vld [vmem:[%s5 + $0x4] sm:$0xf]
      %v703 = vld [vmem:[%s5 + $0x8] sm:$0xf]
      %v704 = vld [vmem:[%s5 + $0xc] sm:$0xf]
      %v705 = vld [vmem:[%s5 + $0x10] sm:$0xf]
      %v706 = vld [vmem:[%s5 + $0x14] sm:$0xf]
      %v707 = vld [vmem:[%s5 + $0x18] sm:$0xf]
      %v708 = vld [vmem:[%s5 + $0x1c] sm:$0xf]
      %v709 = vld [vmem:[%s5 + $0x20] sm:$0xf]
      %v710 = vld [vmem:[%s5 + $0x24] sm:$0xf]
      %v711 = vld [vmem:[%s5 + $0x28] sm:$0xf]
      %v712 = vld [vmem:[%s5 + $0x2c] sm:$0xf]
      %v713 = vld [vmem:[%s5 + $0x30] sm:$0xf]
      %v714 = vld [vmem:[%s5 + $0x34] sm:$0xf]
      %v715 = vld [vmem:[%s5 + $0x38] sm:$0xf]
      %v716 = vld [vmem:[%s5 + $0x3c] sm:$0xf]
      %v717 = vld [vmem:[%s6] sm:$0x1]
      %v719 = vperm.slane %v717, 0
      %v737 = vunpack.c.l.b16 %v701
      %v738 = vunpack.c.l.b16 %v702
      %v739 = vunpack.c.l.b16 %v703
      %v740 = vunpack.c.l.b16 %v704
      %v741 = vunpack.c.l.b16 %v705
      %v742 = vunpack.c.l.b16 %v706
      %v743 = vunpack.c.l.b16 %v707
      %v744 = vunpack.c.l.b16 %v708
      %v745 = vunpack.c.l.b16 %v709
      %v746 = vunpack.c.l.b16 %v710
      %v747 = vunpack.c.l.b16 %v711
      %v748 = vunpack.c.l.b16 %v712
      %v749 = vunpack.c.l.b16 %v713
      %v750 = vunpack.c.l.b16 %v714
      %v751 = vunpack.c.l.b16 %v715
      %v752 = vunpack.c.l.b16 %v716
      %v753 = vpack.c.b16 %v738, %v737
      %v754 = vpack.c.b16 %v740, %v739
      %v755 = vpack.c.b16 %v742, %v741
      %v756 = vpack.c.b16 %v744, %v743
      %v757 = vpack.c.b16 %v746, %v745
      %v758 = vpack.c.b16 %v748, %v747
      %v759 = vpack.c.b16 %v750, %v749
      %v760 = vpack.c.b16 %v752, %v751
      %769 = vmatpush.bf16.msra.mxu0 %v760
      %770 = vmatpush.bf16.msra.mxu0 %v759
      %771 = vmatpush.bf16.msra.mxu0 %v758
      %772 = vmatpush.bf16.msra.mxu0 %v757
      %773 = vmatpush.bf16.msra.mxu0 %v756
      %774 = vmatpush.bf16.msra.mxu0 %v755
      %775 = vmatpush.bf16.msra.mxu0 %v754
      %776 = vmatpush.bf16.msra.mxu0 %v753
      %777 = vmatmul.bf16.gmra.mxu0 %v693
      %v778 = vpop.f32.mrf.mxu0
      %v779 = vadd.f32 %v719, %v778
      %v780 = vpop.f32.mrf.mxu0
      %v781 = vadd.f32 %v719, %v780
      %782 = vmatmul.bf16.gmra.mxu0 %v694
      %v783 = vpop.f32.mrf.mxu0
      %v784 = vadd.f32 %v719, %v783
      %v785 = vpop.f32.mrf.mxu0
      %v786 = vadd.f32 %v719, %v785
      %787 = vmatmul.bf16.gmra.mxu0 %v695
      %v788 = vpop.f32.mrf.mxu0
      %v789 = vadd.f32 %v719, %v788
      %v790 = vpop.f32.mrf.mxu0
      %v791 = vadd.f32 %v719, %v790
      %792 = vmatmul.bf16.gmra.mxu0 %v696
      %v793 = vpop.f32.mrf.mxu0
      %v794 = vadd.f32 %v719, %v793
      %v795 = vpop.f32.mrf.mxu0
      %v796 = vadd.f32 %v719, %v795
      %797 = vmatmul.bf16.gmra.mxu0 %v697
      %v798 = vpop.f32.mrf.mxu0
      %v799 = vadd.f32 %v719, %v798
      %v800 = vpop.f32.mrf.mxu0
      %v801 = vadd.f32 %v719, %v800
      %802 = vmatmul.bf16.gmra.mxu0 %v698
      %v803 = vpop.f32.mrf.mxu0
      %v804 = vadd.f32 %v719, %v803
      %v805 = vpop.f32.mrf.mxu0
      %v806 = vadd.f32 %v719, %v805
      %807 = vmatmul.bf16.gmra.mxu0 %v699
      %v808 = vpop.f32.mrf.mxu0
      %v809 = vadd.f32 %v719, %v808
      %v810 = vpop.f32.mrf.mxu0
      %v811 = vadd.f32 %v719, %v810
      %812 = vmatmul.bf16.gmra.mxu0 %v700
      %v813 = vpop.f32.mrf.mxu0
      %v814 = vadd.f32 %v719, %v813
      %v815 = vpop.f32.mrf.mxu0
      %v816 = vadd.f32 %v719, %v815
      %817 = vdwg.mxu0
      %v818 = vlaneseq
      %v819 = vand.u32 %v818, 127
      %vm820 = vcmp.lt.s32.totalorder %v819, 8
      %v821 = vsel %vm820, %v779, -1e+30
      %v822 = vsel %vm820, %v781, -1e+30
      %v823 = vsel %vm820, %v784, -1e+30
      %v824 = vsel %vm820, %v786, -1e+30
      %v825 = vsel %vm820, %v789, -1e+30
      %v826 = vsel %vm820, %v791, -1e+30
      %v827 = vsel %vm820, %v794, -1e+30
      %v828 = vsel %vm820, %v796, -1e+30
      %v829 = vsel %vm820, %v799, -1e+30
      %v830 = vsel %vm820, %v801, -1e+30
      %v831 = vsel %vm820, %v804, -1e+30
      %v832 = vsel %vm820, %v806, -1e+30
      %v833 = vsel %vm820, %v809, -1e+30
      %v834 = vsel %vm820, %v811, -1e+30
      %v835 = vsel %vm820, %v814, -1e+30
      %v836 = vsel %vm820, %v816, -1e+30
      %837 = vmax.xlane.f32.xlu0 %v821
      %v838 = vpop.xlane.xlu0 %837
      %839 = vmax.xlane.f32.xlu0 %v822
      %v840 = vpop.xlane.xlu0 %839
      %841 = vmax.xlane.f32.xlu0 %v823
      %v842 = vpop.xlane.xlu0 %841
      %843 = vmax.xlane.f32.xlu0 %v824
      %v844 = vpop.xlane.xlu0 %843
      %845 = vmax.xlane.f32.xlu0 %v825
      %v846 = vpop.xlane.xlu0 %845
      %847 = vmax.xlane.f32.xlu0 %v826
      %v848 = vpop.xlane.xlu0 %847
      %849 = vmax.xlane.f32.xlu0 %v827
      %v850 = vpop.xlane.xlu0 %849
      %851 = vmax.xlane.f32.xlu0 %v828
      %v852 = vpop.xlane.xlu0 %851
      %853 = vmax.xlane.f32.xlu0 %v829
      %v854 = vpop.xlane.xlu0 %853
      %855 = vmax.xlane.f32.xlu0 %v830
      %v856 = vpop.xlane.xlu0 %855
      %857 = vmax.xlane.f32.xlu0 %v831
      %v858 = vpop.xlane.xlu0 %857
      %859 = vmax.xlane.f32.xlu0 %v832
      %v860 = vpop.xlane.xlu0 %859
      %861 = vmax.xlane.f32.xlu0 %v833
      %v862 = vpop.xlane.xlu0 %861
      %863 = vmax.xlane.f32.xlu0 %v834
      %v864 = vpop.xlane.xlu0 %863
      %865 = vmax.xlane.f32.xlu0 %v835
      %v866 = vpop.xlane.xlu0 %865
      %867 = vmax.xlane.f32.xlu0 %v836
      %v868 = vpop.xlane.xlu0 %867
      %v869 = vsub.f32 %v821, %v838
      %v870 = vsub.f32 %v822, %v840
      %v871 = vsub.f32 %v823, %v842
      %v872 = vsub.f32 %v824, %v844
      %v873 = vsub.f32 %v825, %v846
      %v874 = vsub.f32 %v826, %v848
      %v875 = vsub.f32 %v827, %v850
      %v876 = vsub.f32 %v828, %v852
      %v877 = vsub.f32 %v829, %v854
      %v878 = vsub.f32 %v830, %v856
      %v879 = vsub.f32 %v831, %v858
      %v880 = vsub.f32 %v832, %v860
      %v881 = vsub.f32 %v833, %v862
      %v882 = vsub.f32 %v834, %v864
      %v883 = vsub.f32 %v835, %v866
      %v884 = vsub.f32 %v836, %v868
      %v885 = vmul.f32 %v869, 1.442695
      %v886 = vpow.pop %v885
      %v887 = vmul.f32 %v870, 1.442695
      %v888 = vpow.pop %v887
      %v889 = vmul.f32 %v871, 1.442695
      %v890 = vpow.pop %v889
      %v891 = vmul.f32 %v872, 1.442695
      %v892 = vpow.pop %v891
      %v893 = vmul.f32 %v873, 1.442695
      %v894 = vpow.pop %v893
      %v895 = vmul.f32 %v874, 1.442695
      %v896 = vpow.pop %v895
      %v897 = vmul.f32 %v875, 1.442695
      %v898 = vpow.pop %v897
      %v899 = vmul.f32 %v876, 1.442695
      %v900 = vpow.pop %v899
      %v901 = vmul.f32 %v877, 1.442695
      %v902 = vpow.pop %v901
      %v903 = vmul.f32 %v878, 1.442695
      %v904 = vpow.pop %v903
      %v905 = vmul.f32 %v879, 1.442695
      %v906 = vpow.pop %v905
      %v907 = vmul.f32 %v880, 1.442695
      %v908 = vpow.pop %v907
      %v909 = vmul.f32 %v881, 1.442695
      %v910 = vpow.pop %v909
      %v911 = vmul.f32 %v882, 1.442695
      %v912 = vpow.pop %v911
      %v913 = vmul.f32 %v883, 1.442695
      %v914 = vpow.pop %v913
      %v915 = vmul.f32 %v884, 1.442695
      %v916 = vpow.pop %v915
      %917 = vadd.xlane.f32.xlu0 %v886
      %v918 = vpop.xlane.xlu0 %917
      %919 = vadd.xlane.f32.xlu0 %v888
      %v920 = vpop.xlane.xlu0 %919
      %921 = vadd.xlane.f32.xlu0 %v890
      %v922 = vpop.xlane.xlu0 %921
      %923 = vadd.xlane.f32.xlu0 %v892
      %v924 = vpop.xlane.xlu0 %923
      %925 = vadd.xlane.f32.xlu0 %v894
      %v926 = vpop.xlane.xlu0 %925
      %927 = vadd.xlane.f32.xlu0 %v896
      %v928 = vpop.xlane.xlu0 %927
      %929 = vadd.xlane.f32.xlu0 %v898
      %v930 = vpop.xlane.xlu0 %929
      %931 = vadd.xlane.f32.xlu0 %v900
      %v932 = vpop.xlane.xlu0 %931
      %933 = vadd.xlane.f32.xlu0 %v902
      %v934 = vpop.xlane.xlu0 %933
      %935 = vadd.xlane.f32.xlu0 %v904
      %v936 = vpop.xlane.xlu0 %935
      %937 = vadd.xlane.f32.xlu0 %v906
      %v938 = vpop.xlane.xlu0 %937
      %939 = vadd.xlane.f32.xlu0 %v908
      %v940 = vpop.xlane.xlu0 %939
      %941 = vadd.xlane.f32.xlu0 %v910
      %v942 = vpop.xlane.xlu0 %941
      %943 = vadd.xlane.f32.xlu0 %v912
      %v944 = vpop.xlane.xlu0 %943
      %945 = vadd.xlane.f32.xlu0 %v914
      %v946 = vpop.xlane.xlu0 %945
      %947 = vadd.xlane.f32.xlu0 %v916
      %v948 = vpop.xlane.xlu0 %947
      %v949 = vlog2.pop %v918
      %v950 = vmul.f32 %v949, 0.6931472
      %v951 = vlog2.pop %v920
      %v952 = vmul.f32 %v951, 0.6931472
      %v953 = vlog2.pop %v922
      %v954 = vmul.f32 %v953, 0.6931472
      %v955 = vlog2.pop %v924
      %v956 = vmul.f32 %v955, 0.6931472
      %v957 = vlog2.pop %v926
      %v958 = vmul.f32 %v957, 0.6931472
      %v959 = vlog2.pop %v928
      %v960 = vmul.f32 %v959, 0.6931472
      %v961 = vlog2.pop %v930
      %v962 = vmul.f32 %v961, 0.6931472
      %v963 = vlog2.pop %v932
      %v964 = vmul.f32 %v963, 0.6931472
      %v965 = vlog2.pop %v934
      %v966 = vmul.f32 %v965, 0.6931472
      %v967 = vlog2.pop %v936
      %v968 = vmul.f32 %v967, 0.6931472
      %v969 = vlog2.pop %v938
      %v970 = vmul.f32 %v969, 0.6931472
      %v971 = vlog2.pop %v940
      %v972 = vmul.f32 %v971, 0.6931472
      %v973 = vlog2.pop %v942
      %v974 = vmul.f32 %v973, 0.6931472
      %v975 = vlog2.pop %v944
      %v976 = vmul.f32 %v975, 0.6931472
      %v977 = vlog2.pop %v946
      %v978 = vmul.f32 %v977, 0.6931472
      %v979 = vlog2.pop %v948
      %v980 = vmul.f32 %v979, 0.6931472
      %v981 = vsub.f32 %v869, %v950
      %v982 = vsub.f32 %v870, %v952
      %v983 = vsub.f32 %v871, %v954
      %v984 = vsub.f32 %v872, %v956
      %v985 = vsub.f32 %v873, %v958
      %v986 = vsub.f32 %v874, %v960
      %v987 = vsub.f32 %v875, %v962
      %v988 = vsub.f32 %v876, %v964
      %v989 = vsub.f32 %v877, %v966
      %v990 = vsub.f32 %v878, %v968
      %v991 = vsub.f32 %v879, %v970
      %v992 = vsub.f32 %v880, %v972
      %v993 = vsub.f32 %v881, %v974
      %v994 = vsub.f32 %v882, %v976
      %v995 = vsub.f32 %v883, %v978
      %v996 = vsub.f32 %v884, %v980
      %997 = vst [vmem:[%s7] sm:$0xff] %v981
      %998 = vst [vmem:[%s7 + $0x8] sm:$0xff] %v982
      %999 = vst [vmem:[%s7 + $0x10] sm:$0xff] %v983
      %1000 = vst [vmem:[%s7 + $0x18] sm:$0xff] %v984
      %1001 = vst [vmem:[%s7 + $0x20] sm:$0xff] %v985
      %1002 = vst [vmem:[%s7 + $0x28] sm:$0xff] %v986
      %1003 = vst [vmem:[%s7 + $0x30] sm:$0xff] %v987
      %1004 = vst [vmem:[%s7 + $0x38] sm:$0xff] %v988
      %1005 = vst [vmem:[%s7 + $0x40] sm:$0xff] %v989
      %1006 = vst [vmem:[%s7 + $0x48] sm:$0xff] %v990
      %1007 = vst [vmem:[%s7 + $0x50] sm:$0xff] %v991
      %1008 = vst [vmem:[%s7 + $0x58] sm:$0xff] %v992
      %1009 = vst [vmem:[%s7 + $0x60] sm:$0xff] %v993
      %1010 = vst [vmem:[%s7 + $0x68] sm:$0xff] %v994
      %1011 = vst [vmem:[%s7 + $0x70] sm:$0xff] %v995
      %1012 = vst [vmem:[%s7 + $0x78] sm:$0xff] %v996
    $region119: #{sagenet_forward.7} parent=1 // pred_fallthru
      _
    // Predicated region
    $region120: #{sagenet_forward.7} parent=1 // pred_check
      _
    $region121: #{sagenet_forward.7} parent=1 // pred_check_branch
      %1014 = sbr.rel (0) target = $region123
    $region122: #{sagenet_forward.7} parent=1 // pred_region
      _
    $region123: #{sagenet_forward.7} parent=1 // pred_fallthru
      _
    // Predicated region
    $region124: #{sagenet_forward.7} parent=1 // pred_check
      _
    $region125: #{sagenet_forward.7} parent=1 // pred_check_branch
      %1016 = sbr.rel (0) target = $region127
    $region126: #{sagenet_forward.7} parent=1 // pred_region
      _
    $region127: #{sagenet_forward.7} parent=1 // pred_fallthru
      _

</llo_original>
